<compile_context>
chip_gen: v7x
topology: tpu7x:2x2x1
jax: 0.10.0
libtpu: 0.0.40
codegen_flags: <defaults>
</compile_context>

<pallas_src>
import jax
import jax.numpy as jnp
from jax.experimental import pallas as pl
from jax.experimental.pallas import tpu as pltpu


def _mask_predictor_kernel(x_ref, w1_ref, b1_ref, w2_ref, b2_ref, o_ref):
    # x_ref : (TP, Cin)           bf16
    # w1_ref: (Cin, KK*Cout)      bf16  transposed-conv weights; column block k = sub-pixel k
    # b1_ref: (1, KK*Cout)        f32
    # w2_ref: (Cout, NCLS_PAD)    bf16  1x1 conv weights (class dim zero-padded)
    # b2_ref: (1, KK*NCLS_PAD)    f32   pre-tiled across the KK sub-pixel blocks
    # o_ref : (TP, KK*NCLS_PAD)   f32   logits; column block k = sub-pixel k
    cout = w2_ref.shape[0]
    kk = w1_ref.shape[1] // cout

    # conv5_mask (2x2/s2 transposed conv) == one channel matmul on the MXU.
    # NOTE: with tiny Cin (demo Cin=4) the MXU contraction is mostly padding;
    # for the canonical Cin=256 this is a full-K matmul.
    h = jnp.dot(x_ref[...], w1_ref[...], preferred_element_type=jnp.float32)
    # bias + ReLU in f32 (v5e VPU has no bf16), then drop to bf16 for the
    # second MXU pass to halve the intermediate's VMEM footprint.
    h = jnp.maximum(h + b1_ref[...], 0.0).astype(jnp.bfloat16)

    # mask_fcn_logits (1x1 conv): one matmul per sub-pixel position (kk == 4,
    # static unroll).  Results are concatenated along lanes so the writeback is
    # a single full-width, unmasked store (lane-dense out_spec).
    # NOTE: the h slices are lane-aligned when Cout % 128 == 0 (canonical 256).
    outs = []
    for k in range(kk):
        hk = h[:, k * cout:(k + 1) * cout]
        outs.append(jnp.dot(hk, w2_ref[...], preferred_element_type=jnp.float32))
    o_ref[...] = jnp.concatenate(outs, axis=-1) + b2_ref[...]


def roi_mask_predictor(x_nchw, w1, b1, w2, b2, *, tile_p=512):
    """x_nchw: (N, Cin, H, W) float32.
    w1: (Cin, Cout, 2, 2) ConvTranspose2d weight, b1: (Cout,)
    w2: (Cout, NCLS)      1x1 Conv weight (already squeezed), b2: (NCLS,)
    returns logits (N, NCLS, 2H, 2W) float32 (NCHW, PyTorch convention)."""
    N, Cin, H, W = x_nchw.shape
    Cout = w1.shape[1]
    KH, KW = w1.shape[2], w1.shape[3]
    KK = KH * KW
    NCLS = w2.shape[1]

    # Pad class dim so KK*NCLS_PAD is a multiple of 128 -> unmasked output vst
    # (e.g. canonical NCLS=81 -> 96, 4*96 = 384).
    assert KK == 4, "canonical predictor uses a 2x2 deconv"
    NCLS_PAD = ((NCLS + 31) // 32) * 32

    P = N * H * W
    P_pad = pl.cdiv(P, tile_p) * tile_p

    # Flatten pixels (NHWC order) -> (P, Cin), zero-pad rows, cast to bf16.
    # TODO(synk): in an NHWC pipeline both this transpose and the output
    # transpose below disappear (they are full-tensor HBM reshuffles).
    x_flat = jnp.transpose(x_nchw, (0, 2, 3, 1)).reshape(P, Cin)
    if P_pad != P:
        x_flat = jnp.pad(x_flat, ((0, P_pad - P), (0, 0)))
    x_flat = x_flat.astype(jnp.bfloat16)

    # Pack transposed-conv weight: (Cin, Cout, kh, kw) -> (Cin, kh*kw*Cout).
    w1_packed = (jnp.transpose(w1, (0, 2, 3, 1))
                 .reshape(Cin, KK * Cout).astype(jnp.bfloat16))
    b1_packed = jnp.tile(b1, (KK,)).reshape(1, KK * Cout).astype(jnp.float32)
    w2_packed = jnp.pad(w2, ((0, 0), (0, NCLS_PAD - NCLS))).astype(jnp.bfloat16)
    # Pre-tile the 1x1-conv bias to full output width -> single add in-kernel.
    b2_packed = jnp.tile(jnp.pad(b2, (0, NCLS_PAD - NCLS)), (KK,)) \
                   .reshape(1, KK * NCLS_PAD).astype(jnp.float32)

    out_flat = pl.pallas_call(
        _mask_predictor_kernel,
        out_shape=jax.ShapeDtypeStruct((P_pad, KK * NCLS_PAD), jnp.float32),
        grid_spec=pltpu.PrefetchScalarGridSpec(
            num_scalar_prefetch=0,
            grid=(P_pad // tile_p,),
            in_specs=[
                pl.BlockSpec((tile_p, Cin), lambda i: (i, 0)),
                pl.BlockSpec((Cin, KK * Cout), lambda i: (0, 0)),
                pl.BlockSpec((1, KK * Cout), lambda i: (0, 0)),
                pl.BlockSpec((Cout, NCLS_PAD), lambda i: (0, 0)),
                pl.BlockSpec((1, KK * NCLS_PAD), lambda i: (0, 0)),
            ],
            out_specs=pl.BlockSpec((tile_p, KK * NCLS_PAD), lambda i: (i, 0)),
        ),
        # NOTE: with canonical channels (Cin=Cout=256, NCLS_PAD=96) the
        # double-buffered tiles fit comfortably under the default scoped VMEM
        # limit up to tile_p=2048; raise vmem_limit_bytes only if sweeping
        # beyond that (v7x has only 64 MiB physical VMEM).
        compiler_params=pltpu.CompilerParams(
            dimension_semantics=("parallel",)),
    )(x_flat, w1_packed, b1_packed, w2_packed, b2_packed)

    # (P_pad, KK*NCLS_PAD) -> (N, H, W, KH, KW, NCLS) -> (N, NCLS, 2H, 2W)
    out = out_flat[:P].reshape(N, H, W, KH, KW, NCLS_PAD)[..., :NCLS]
    out = jnp.transpose(out, (0, 5, 1, 3, 2, 4)).reshape(N, NCLS, H * KH, W * KW)
    return out


def _reference(x, w1, b1, w2, b2):
    """Pure-JAX f32 reference of relu(conv_transpose2x2_s2(x)) -> conv1x1."""
    N, Cin, H, W = x.shape
    Cout = w1.shape[1]
    # y[n, co, 2h+kh, 2w+kw] = sum_ci x[n,ci,h,w] * w1[ci,co,kh,kw]
    y = jnp.einsum('nchw,cokl->nohkwl', x, w1)
    y = y.reshape(N, Cout, 2 * H, 2 * W) + b1[None, :, None, None]
    y = jnp.maximum(y, 0.0)
    logits = jnp.einsum('nchw,cd->ndhw', y, w2) + b2[None, :, None, None]
    return logits


if __name__ == "__main__":
    # small, deterministic shapes
    N, CIN, H, W = 2, 4, 16, 16
    DIM_REDUCED, NUM_CLASSES = 32, 8

    key = jax.random.PRNGKey(0)
    kx, k1, k2, k3, k4 = jax.random.split(key, 5)

    x = jax.random.normal(kx, (N, CIN, H, W), dtype=jnp.float32)
    # ConvTranspose2d(in=CIN, out=DIM_REDUCED, k=2, s=2) weight: (Cin, Cout, 2, 2)
    w1 = jax.random.normal(k1, (CIN, DIM_REDUCED, 2, 2), dtype=jnp.float32) * 0.1
    b1 = jax.random.normal(k2, (DIM_REDUCED,), dtype=jnp.float32) * 0.01
    # Conv2d(DIM_REDUCED, NUM_CLASSES, k=1) weight squeezed to (Cout, NCLS)
    w2 = jax.random.normal(k3, (DIM_REDUCED, NUM_CLASSES), dtype=jnp.float32) * 0.1
    b2 = jax.random.normal(k4, (NUM_CLASSES,), dtype=jnp.float32) * 0.01

    # tile_p=256 here so the demo exercises a multi-step (and even-length) grid;
    # production default is 512 (sweep 512-2048 on real shapes).
    out = roi_mask_predictor(x, w1, b1, w2, b2, tile_p=256)
    out = jax.block_until_ready(out)

    ref = jax.block_until_ready(_reference(x, w1, b1, w2, b2))
    assert out.shape == (N, NUM_CLASSES, 2 * H, 2 * W), out.shape
    # bf16 feed to the MXU -> loosen tolerance vs. the pure-f32 reference.
    assert jnp.allclose(out, ref, atol=5e-2, rtol=5e-2), (
        "mismatch vs reference, max abs err = %e"
        % float(jnp.max(jnp.abs(out - ref))))

    print("KERNEL_OK")
</pallas_src>

<mosaic_0001>
module attributes {stable_mosaic.version = 11 : i64} {
  func.func @_mask_predictor_kernel(%arg0: i32, %arg1: memref<256x4xbf16, #tpu.memory_space<vmem>>, %arg2: memref<4x128xbf16, #tpu.memory_space<vmem>>, %arg3: memref<1x128xf32, #tpu.memory_space<vmem>>, %arg4: memref<32x32xbf16, #tpu.memory_space<vmem>>, %arg5: memref<1x128xf32, #tpu.memory_space<vmem>>, %arg6: memref<256x128xf32, #tpu.memory_space<vmem>>) attributes {dimension_semantics = [#tpu.dimension_semantics<parallel>], iteration_bounds = array<i64: 2>, scalar_prefetch = 0 : i64, scratch_operands = 0 : i64, tpu.core_type = #tpu.core_type<tc>, window_params = [{transform_indices = @transform_0, window_bounds = array<i64: 256, 4>}, {pipeline_mode = #tpu.pipeline_mode<synchronous>, transform_indices = @transform_1, window_bounds = array<i64: 4, 128>}, {pipeline_mode = #tpu.pipeline_mode<synchronous>, transform_indices = @transform_2, window_bounds = array<i64: 1, 128>}, {pipeline_mode = #tpu.pipeline_mode<synchronous>, transform_indices = @transform_3, window_bounds = array<i64: 32, 32>}, {pipeline_mode = #tpu.pipeline_mode<synchronous>, transform_indices = @transform_4, window_bounds = array<i64: 1, 128>}, {transform_indices = @transform_5, window_bounds = array<i64: 256, 128>}]} {
    %c0 = arith.constant 0 : index
    %c0_0 = arith.constant 0 : index
    %0 = vector.load %arg1[%c0, %c0_0] : memref<256x4xbf16, #tpu.memory_space<vmem>>, vector<256x4xbf16>
    %c0_1 = arith.constant 0 : index
    %c0_2 = arith.constant 0 : index
    %1 = vector.load %arg2[%c0_1, %c0_2] : memref<4x128xbf16, #tpu.memory_space<vmem>>, vector<4x128xbf16>
    %cst = arith.constant dense<0.000000e+00> : vector<256x128xf32>
    %2 = tpu.matmul %0, %1, %cst {dimension_numbers = #tpu.dot_dimension_numbers<[1], [0], [0], [1], [0, 0, 1, 1], [], []>} : vector<256x4xbf16>, vector<4x128xbf16>, vector<256x128xf32> -> vector<256x128xf32>
    %c0_3 = arith.constant 0 : index
    %c0_4 = arith.constant 0 : index
    %3 = vector.load %arg3[%c0_3, %c0_4] : memref<1x128xf32, #tpu.memory_space<vmem>>, vector<1x128xf32>
    %4 = vector.broadcast %3 : vector<1x128xf32> to vector<256x128xf32>
    %5 = arith.addf %2, %4 : vector<256x128xf32>
    %cst_5 = arith.constant 0.000000e+00 : f32
    %6 = vector.broadcast %cst_5 : f32 to vector<256x128xf32>
    %7 = arith.maximumf %5, %6 : vector<256x128xf32>
    %8 = arith.truncf %7 : vector<256x128xf32> to vector<256x128xbf16>
    %9 = vector.extract_strided_slice %8 {offsets = [0, 0], sizes = [256, 32], strides = [1, 1]} : vector<256x128xbf16> to vector<256x32xbf16>
    %c0_6 = arith.constant 0 : index
    %c0_7 = arith.constant 0 : index
    %10 = vector.load %arg4[%c0_6, %c0_7] : memref<32x32xbf16, #tpu.memory_space<vmem>>, vector<32x32xbf16>
    %cst_8 = arith.constant dense<0.000000e+00> : vector<256x32xf32>
    %11 = tpu.matmul %9, %10, %cst_8 {dimension_numbers = #tpu.dot_dimension_numbers<[1], [0], [0], [1], [0, 0, 1, 1], [], []>} : vector<256x32xbf16>, vector<32x32xbf16>, vector<256x32xf32> -> vector<256x32xf32>
    %12 = vector.extract_strided_slice %8 {offsets = [0, 32], sizes = [256, 32], strides = [1, 1]} : vector<256x128xbf16> to vector<256x32xbf16>
    %c0_9 = arith.constant 0 : index
    %c0_10 = arith.constant 0 : index
    %13 = vector.load %arg4[%c0_9, %c0_10] : memref<32x32xbf16, #tpu.memory_space<vmem>>, vector<32x32xbf16>
    %cst_11 = arith.constant dense<0.000000e+00> : vector<256x32xf32>
    %14 = tpu.matmul %12, %13, %cst_11 {dimension_numbers = #tpu.dot_dimension_numbers<[1], [0], [0], [1], [0, 0, 1, 1], [], []>} : vector<256x32xbf16>, vector<32x32xbf16>, vector<256x32xf32> -> vector<256x32xf32>
    %15 = vector.extract_strided_slice %8 {offsets = [0, 64], sizes = [256, 32], strides = [1, 1]} : vector<256x128xbf16> to vector<256x32xbf16>
    %c0_12 = arith.constant 0 : index
    %c0_13 = arith.constant 0 : index
    %16 = vector.load %arg4[%c0_12, %c0_13] : memref<32x32xbf16, #tpu.memory_space<vmem>>, vector<32x32xbf16>
    %cst_14 = arith.constant dense<0.000000e+00> : vector<256x32xf32>
    %17 = tpu.matmul %15, %16, %cst_14 {dimension_numbers = #tpu.dot_dimension_numbers<[1], [0], [0], [1], [0, 0, 1, 1], [], []>} : vector<256x32xbf16>, vector<32x32xbf16>, vector<256x32xf32> -> vector<256x32xf32>
    %18 = vector.extract_strided_slice %8 {offsets = [0, 96], sizes = [256, 32], strides = [1, 1]} : vector<256x128xbf16> to vector<256x32xbf16>
    %c0_15 = arith.constant 0 : index
    %c0_16 = arith.constant 0 : index
    %19 = vector.load %arg4[%c0_15, %c0_16] : memref<32x32xbf16, #tpu.memory_space<vmem>>, vector<32x32xbf16>
    %cst_17 = arith.constant dense<0.000000e+00> : vector<256x32xf32>
    %20 = tpu.matmul %18, %19, %cst_17 {dimension_numbers = #tpu.dot_dimension_numbers<[1], [0], [0], [1], [0, 0, 1, 1], [], []>} : vector<256x32xbf16>, vector<32x32xbf16>, vector<256x32xf32> -> vector<256x32xf32>
    %21 = tpu.concatenate %11, %14, %17, %20 in 1 : vector<256x32xf32>, vector<256x32xf32>, vector<256x32xf32>, vector<256x32xf32> -> vector<256x128xf32>
    %c0_18 = arith.constant 0 : index
    %c0_19 = arith.constant 0 : index
    %22 = vector.load %arg5[%c0_18, %c0_19] : memref<1x128xf32, #tpu.memory_space<vmem>>, vector<1x128xf32>
    %23 = vector.broadcast %22 : vector<1x128xf32> to vector<256x128xf32>
    %24 = arith.addf %21, %23 : vector<256x128xf32>
    %c0_20 = arith.constant 0 : index
    %c0_21 = arith.constant 0 : index
    %25 = vector.load %arg6[%c0_20, %c0_21] : memref<256x128xf32, #tpu.memory_space<vmem>>, vector<256x128xf32>
    tpu.vector_store %arg6[%c0_20, %c0_21], %24 {strides = array<i32>} : memref<256x128xf32, #tpu.memory_space<vmem>>, vector<256x128xf32>,
    return
  }
  func.func @transform_0(%arg0: i32) -> (i32, i32) {
    %c0_i32 = arith.constant 0 : i32
    %c0_i32_0 = arith.constant 0 : i32
    return %arg0, %c0_i32 : i32, i32
  }
  func.func @transform_1(%arg0: i32) -> (i32, i32) {
    %c0_i32 = arith.constant 0 : i32
    %c0_i32_0 = arith.constant 0 : i32
    %c0_i32_1 = arith.constant 0 : i32
    return %c0_i32, %c0_i32_0 : i32, i32
  }
  func.func @transform_2(%arg0: i32) -> (i32, i32) {
    %c0_i32 = arith.constant 0 : i32
    %c0_i32_0 = arith.constant 0 : i32
    %c0_i32_1 = arith.constant 0 : i32
    return %c0_i32, %c0_i32_0 : i32, i32
  }
  func.func @transform_3(%arg0: i32) -> (i32, i32) {
    %c0_i32 = arith.constant 0 : i32
    %c0_i32_0 = arith.constant 0 : i32
    %c0_i32_1 = arith.constant 0 : i32
    return %c0_i32, %c0_i32_0 : i32, i32
  }
  func.func @transform_4(%arg0: i32) -> (i32, i32) {
    %c0_i32 = arith.constant 0 : i32
    %c0_i32_0 = arith.constant 0 : i32
    %c0_i32_1 = arith.constant 0 : i32
    return %c0_i32, %c0_i32_0 : i32, i32
  }
  func.func @transform_5(%arg0: i32) -> (i32, i32) {
    %c0_i32 = arith.constant 0 : i32
    %c0_i32_0 = arith.constant 0 : i32
    return %arg0, %c0_i32 : i32, i32
  }
}

</mosaic_0001>

<llo_original>
// kernel: tpu_custom_call.1
$region0: #{tpu_custom_call.1}
  #allocation0 [shape = 'u32[]', space=smem, size = 0x4, offset = 0x4, fixed_abs, tag = 'smem constant byte address 0x4 - core index']
  #allocation1 [shape = 'u32[144,128]{1,0:T(1,128)}', space=vmem, size = 0x12000, scoped, tag = 'internal scratch']
  %s0 = inlined_call_operand.vmem [shape: bf16[512,4], index: 0, kind: input, shape index: {}]
  %s1 = inlined_call_operand.vmem [shape: bf16[4,128], index: 1, kind: input, shape index: {}]
  %s2 = inlined_call_operand.vmem [shape: f32[1,128], index: 2, kind: input, shape index: {}]
  %s3 = inlined_call_operand.vmem [shape: bf16[32,32], index: 3, kind: input, shape index: {}]
  %s4 = inlined_call_operand.vmem [shape: f32[1,128], index: 4, kind: input, shape index: {}]
  %s5 = inlined_call_operand.hbm [shape: f32[512,128], index: 5, kind: output, shape index: {}]
  %s6 = sld [smem:[#allocation0]]
  $region53: #{tpu_custom_call.1} parent=0
    _
  %s8 = ssub.s32 1, %s6
  %s9 = scalar_select 0, %s8, %s6
  $region1: #{tpu_custom_call.1} parent=0
    #allocation2 [shape = 'u8[262144]{0}', space=vmem, size = 0x40000, scoped, tag = 'output window, operand 0']
    #allocation3 [shape = 's32[2]{0}', space=sflag, size = 0x8, scoped, tag = 'scoped memory for tpu_custom_call.1']
    %10 = vsyncpa [#allocation3], 0
    %s11 = scalar_lea.sflag [#allocation3], 1
    %12 = vsyncpa %s11, 0
    loop: start=0, step=1, limit=4
    $region2: #{tpu_custom_call.1} parent=1 // loop_pre_header
      _
    $region3: #{tpu_custom_call.1} parent=1 // loop_header
      %s14 = sphi 0, %s18
      %p15 = scmp.ge.s32.totalorder %s14, 4
      %s24 = sphi 0, %s26
      %s27 = sphi 0, %s24
      %s28 = sphi 0, %s27
      %s44 = sphi 0, %s28
      %s48 = sphi 0, %s48
      %s50 = sphi 0, %s48
      %s51 = sphi 0, %s50
      %s65 = sphi 0, %s51
      %s69 = sphi 0, %s69
      %s71 = sphi 0, %s69
      %s72 = sphi 0, %s71
      %s86 = sphi 0, %s72
      %s90 = sphi 0, %s90
      %s92 = sphi 0, %s90
      %s93 = sphi 0, %s92
      %s107 = sphi 0, %s93
      %s111 = sphi 0, %s111
      %s113 = sphi 0, %s111
      %s114 = sphi 0, %s113
      %s128 = sphi 0, %s114
      %s134 = sphi 0, %s136
      %s137 = sphi 0, %s134
      %s138 = sphi 0, %s137
      %s154 = sphi 0, %s138
    $region4: #{tpu_custom_call.1} parent=1 // loop_header_branch
      %17 = sbr.rel (%p15) target = $region8
    $region5: #{tpu_custom_call.1} parent=1 // loop_body
      %s19 = ssub.s32 %s14, 1
      %s20 = ssub.s32 %s14, 2
      %s21 = sadd.s32 %s14, 1
      %s22 = ssub.s32 %s14, %s21
      %p23 = scmp.eq.s32.totalorder %s22, 0
      %s25 = sadd.s32 %s24, 1
      %s26 = scalar_select %p23, %s24, %s25
      %p29 = pneg %p23
      %p30 = scmp.eq.s32.totalorder %s14, 1
      %p31 = por %p29, %p30
      %p32 = scmp.ne.s32.totalorder %s24, %s27
      %p33 = scmp.eq.s32.totalorder %s14, 0
      %p34 = por %p32, %p33
      %p35 = scmp.ne.s32.totalorder %s24, %s27
      %p36 = scmp.eq.s32.totalorder %s19, 1
      %p37 = por %p35, %p36
      %p38 = scmp.ne.s32.totalorder %s27, %s28
      %p39 = scmp.eq.s32.totalorder %s19, 0
      %p40 = por %p38, %p39
      %p41 = scmp.ne.s32.totalorder %s27, %s28
      %p42 = scmp.eq.s32.totalorder %s20, 1
      %p43 = por %p41, %p42
      %p45 = scmp.ne.s32.totalorder %s28, %s44
      %p46 = scmp.eq.s32.totalorder %s20, 0
      %p47 = por %p45, %p46
      %s49 = sadd.s32 %s48, 1
      %p52 = scmp.eq.s32.totalorder %s14, 1
      %p53 = scmp.ne.s32.totalorder %s48, %s50
      %p54 = scmp.eq.s32.totalorder %s14, 0
      %p55 = por %p53, %p54
      %p56 = scmp.ne.s32.totalorder %s48, %s50
      %p57 = scmp.eq.s32.totalorder %s19, 1
      %p58 = por %p56, %p57
      %p59 = scmp.ne.s32.totalorder %s50, %s51
      %p60 = scmp.eq.s32.totalorder %s19, 0
      %p61 = por %p59, %p60
      %p62 = scmp.ne.s32.totalorder %s50, %s51
      %p63 = scmp.eq.s32.totalorder %s20, 1
      %p64 = por %p62, %p63
      %p66 = scmp.ne.s32.totalorder %s51, %s65
      %p67 = scmp.eq.s32.totalorder %s20, 0
      %p68 = por %p66, %p67
      %s70 = sadd.s32 %s69, 1
      %p73 = scmp.eq.s32.totalorder %s14, 1
      %p74 = scmp.ne.s32.totalorder %s69, %s71
      %p75 = scmp.eq.s32.totalorder %s14, 0
      %p76 = por %p74, %p75
      %p77 = scmp.ne.s32.totalorder %s69, %s71
      %p78 = scmp.eq.s32.totalorder %s19, 1
      %p79 = por %p77, %p78
      %p80 = scmp.ne.s32.totalorder %s71, %s72
      %p81 = scmp.eq.s32.totalorder %s19, 0
      %p82 = por %p80, %p81
      %p83 = scmp.ne.s32.totalorder %s71, %s72
      %p84 = scmp.eq.s32.totalorder %s20, 1
      %p85 = por %p83, %p84
      %p87 = scmp.ne.s32.totalorder %s72, %s86
      %p88 = scmp.eq.s32.totalorder %s20, 0
      %p89 = por %p87, %p88
      %s91 = sadd.s32 %s90, 1
      %p94 = scmp.eq.s32.totalorder %s14, 1
      %p95 = scmp.ne.s32.totalorder %s90, %s92
      %p96 = scmp.eq.s32.totalorder %s14, 0
      %p97 = por %p95, %p96
      %p98 = scmp.ne.s32.totalorder %s90, %s92
      %p99 = scmp.eq.s32.totalorder %s19, 1
      %p100 = por %p98, %p99
      %p101 = scmp.ne.s32.totalorder %s92, %s93
      %p102 = scmp.eq.s32.totalorder %s19, 0
      %p103 = por %p101, %p102
      %p104 = scmp.ne.s32.totalorder %s92, %s93
      %p105 = scmp.eq.s32.totalorder %s20, 1
      %p106 = por %p104, %p105
      %p108 = scmp.ne.s32.totalorder %s93, %s107
      %p109 = scmp.eq.s32.totalorder %s20, 0
      %p110 = por %p108, %p109
      %s112 = sadd.s32 %s111, 1
      %p115 = scmp.eq.s32.totalorder %s14, 1
      %p116 = scmp.ne.s32.totalorder %s111, %s113
      %p117 = scmp.eq.s32.totalorder %s14, 0
      %p118 = por %p116, %p117
      %p119 = scmp.ne.s32.totalorder %s111, %s113
      %p120 = scmp.eq.s32.totalorder %s19, 1
      %p121 = por %p119, %p120
      %p122 = scmp.ne.s32.totalorder %s113, %s114
      %p123 = scmp.eq.s32.totalorder %s19, 0
      %p124 = por %p122, %p123
      %p125 = scmp.ne.s32.totalorder %s113, %s114
      %p126 = scmp.eq.s32.totalorder %s20, 1
      %p127 = por %p125, %p126
      %p129 = scmp.ne.s32.totalorder %s114, %s128
      %p130 = scmp.eq.s32.totalorder %s20, 0
      %p131 = por %p129, %p130
      %s132 = ssub.s32 %s14, %s21
      %p133 = scmp.eq.s32.totalorder %s132, 0
      %s135 = sadd.s32 %s134, 1
      %s136 = scalar_select %p133, %s134, %s135
      %p139 = pneg %p133
      %p140 = scmp.eq.s32.totalorder %s14, 1
      %p141 = por %p139, %p140
      %p142 = scmp.ne.s32.totalorder %s134, %s137
      %p143 = scmp.eq.s32.totalorder %s14, 0
      %p144 = por %p142, %p143
      %p145 = scmp.ne.s32.totalorder %s134, %s137
      %p146 = scmp.eq.s32.totalorder %s19, 1
      %p147 = por %p145, %p146
      %p148 = scmp.ne.s32.totalorder %s137, %s138
      %p149 = scmp.eq.s32.totalorder %s19, 0
      %p150 = por %p148, %p149
      %p151 = scmp.ne.s32.totalorder %s137, %s138
      %p152 = scmp.eq.s32.totalorder %s20, 1
      %p153 = por %p151, %p152
      %p155 = scmp.ne.s32.totalorder %s138, %s154
      %p156 = scmp.eq.s32.totalorder %s20, 0
      %p157 = por %p155, %p156
      %p158 = scmp.le.s32.totalorder 1, %s14
      %p159 = scmp.lt.s32.totalorder %s14, 3
      %p160 = pnand %p158, %p159
      %p161 = pneg %p160
      // Predicated region
      $region9: #{tpu_custom_call.1} parent=5 // pred_check
        _
      $region10: #{tpu_custom_call.1} parent=5 // pred_check_branch
        %163 = sbr.rel (%p160) target = $region12
      $region11: #{tpu_custom_call.1} parent=5 // pred_region
        %s164 = ssub.s32 %s14, 1
        // Predicated region
        $region13: #{tpu_custom_call.1} parent=11 // pred_check
          %p165 = pneg %p61
        $region14: #{tpu_custom_call.1} parent=11 // pred_check_branch
          %167 = sbr.rel (%p165) target = $region16
        $region15: #{tpu_custom_call.1} parent=11 // pred_region
          _
        $region16: #{tpu_custom_call.1} parent=11 // pred_fallthru
          _
        // Predicated region
        $region17: #{tpu_custom_call.1} parent=11 // pred_check
          %p168 = pneg %p82
        $region18: #{tpu_custom_call.1} parent=11 // pred_check_branch
          %170 = sbr.rel (%p168) target = $region20
        $region19: #{tpu_custom_call.1} parent=11 // pred_region
          _
        $region20: #{tpu_custom_call.1} parent=11 // pred_fallthru
          _
        // Predicated region
        $region21: #{tpu_custom_call.1} parent=11 // pred_check
          %p171 = pneg %p103
        $region22: #{tpu_custom_call.1} parent=11 // pred_check_branch
          %173 = sbr.rel (%p171) target = $region24
        $region23: #{tpu_custom_call.1} parent=11 // pred_region
          _
        $region24: #{tpu_custom_call.1} parent=11 // pred_fallthru
          _
        // Predicated region
        $region25: #{tpu_custom_call.1} parent=11 // pred_check
          %p174 = pneg %p124
        $region26: #{tpu_custom_call.1} parent=11 // pred_check_branch
          %176 = sbr.rel (%p174) target = $region28
        $region27: #{tpu_custom_call.1} parent=11 // pred_region
          _
        $region28: #{tpu_custom_call.1} parent=11 // pred_fallthru
          _
      $region12: #{tpu_custom_call.1} parent=5 // pred_fallthru
        _
      %p177 = scmp.lt.s32.totalorder %s14, 2
      // Predicated region
      $region29: #{tpu_custom_call.1} parent=5 // pred_check
        %p178 = pneg %p177
      $region30: #{tpu_custom_call.1} parent=5 // pred_check_branch
        %180 = sbr.rel (%p178) target = $region32
      $region31: #{tpu_custom_call.1} parent=5 // pred_region
        // Predicated region
        $region33: #{tpu_custom_call.1} parent=31 // pred_check
          %p181 = pneg %p34
        $region34: #{tpu_custom_call.1} parent=31 // pred_check_branch
          %183 = sbr.rel (%p181) target = $region36
        $region35: #{tpu_custom_call.1} parent=31 // pred_region
          %s184 = smul.u32 32, %s14
          %p185 = scmp.lt.s32.totalorder %s184, 63
          %s186 = scalar_select %p185, %s184, 63
          %s187 = smul.addr %s186, 4
          %s188 = scalar_lea.vmem %s0, %s187
          %s189 = smul.u32 32, %s14
        $region36: #{tpu_custom_call.1} parent=31 // pred_fallthru
          _
      $region32: #{tpu_custom_call.1} parent=5 // pred_fallthru
        _
      %p190 = scmp.le.s32.totalorder 1, %s14
      %p191 = scmp.lt.s32.totalorder %s14, 3
      %p192 = pnand %p190, %p191
      %p193 = pneg %p192
      // Predicated region
      $region37: #{tpu_custom_call.1} parent=5 // pred_check
        _
      $region38: #{tpu_custom_call.1} parent=5 // pred_check_branch
        %195 = sbr.rel (%p192) target = $region40
      $region39: #{tpu_custom_call.1} parent=5 // pred_region
        %s196 = ssub.s32 %s14, 1
        %s197 = smul.u32 32, %s19
        %p198 = scmp.lt.s32.totalorder %s197, 63
        %s199 = scalar_select %p198, %s197, 63
        %s200 = smul.addr %s199, 4
        %s201 = scalar_lea.vmem %s0, %s200
        %p202 = pneg %p40
        %p203 = pneg %p37
        %p204 = pneg %p61
        %p205 = pneg %p58
        %p206 = pneg %p82
        %p207 = pneg %p79
        %p208 = pneg %p103
        %p209 = pneg %p100
        %p210 = pneg %p124
        %p211 = pneg %p121
        %p212 = pneg %p150
        %p213 = pneg %p147
        %s214 = sand.u32 %s137, 1
        %s215 = scalar_lea.sflag [#allocation3], %s214
        %s216 = sand.u32 %s137, 1
        %s217 = smul.addr %s216, 256
        %s218 = scalar_lea.vmem [#allocation2], %s217
        %s219 = smul.u32 32, %s19
        %p220 = scmp.lt.s32.totalorder %s219, 63
        %s221 = scalar_select %p220, %s219, 63
        %s222 = smul.addr %s221, 4
        %s223 = scalar_lea.vmem %s0, %s222
        %s224 = smul.u32 32, %s19
        %s225 = smul.u32 32, %s19
        %v227 = vld [vmem:[%s223] sm:$0xf]
        %v228 = vld [vmem:[%s223 + $0x4] sm:$0xf]
        %v229 = vld [vmem:[%s223 + $0x8] sm:$0xf]
        %v230 = vld [vmem:[%s223 + $0xc] sm:$0xf]
        %v231 = vld [vmem:[%s223 + $0x10] sm:$0xf]
        %v232 = vld [vmem:[%s223 + $0x14] sm:$0xf]
        %v233 = vld [vmem:[%s223 + $0x18] sm:$0xf]
        %v234 = vld [vmem:[%s223 + $0x1c] sm:$0xf]
        %v235 = vld [vmem:[%s223 + $0x20] sm:$0xf]
        %v236 = vld [vmem:[%s223 + $0x24] sm:$0xf]
        %v237 = vld [vmem:[%s223 + $0x28] sm:$0xf]
        %v238 = vld [vmem:[%s223 + $0x2c] sm:$0xf]
        %v239 = vld [vmem:[%s223 + $0x30] sm:$0xf]
        %v240 = vld [vmem:[%s223 + $0x34] sm:$0xf]
        %v241 = vld [vmem:[%s223 + $0x38] sm:$0xf]
        %v242 = vld [vmem:[%s223 + $0x3c] sm:$0xf]
        %v243 = vld [vmem:[%s223 + $0x40] sm:$0xf]
        %v244 = vld [vmem:[%s223 + $0x44] sm:$0xf]
        %v245 = vld [vmem:[%s223 + $0x48] sm:$0xf]
        %v246 = vld [vmem:[%s223 + $0x4c] sm:$0xf]
        %v247 = vld [vmem:[%s223 + $0x50] sm:$0xf]
        %v248 = vld [vmem:[%s223 + $0x54] sm:$0xf]
        %v249 = vld [vmem:[%s223 + $0x58] sm:$0xf]
        %v250 = vld [vmem:[%s223 + $0x5c] sm:$0xf]
        %v251 = vld [vmem:[%s223 + $0x60] sm:$0xf]
        %v252 = vld [vmem:[%s223 + $0x64] sm:$0xf]
        %v253 = vld [vmem:[%s223 + $0x68] sm:$0xf]
        %v254 = vld [vmem:[%s223 + $0x6c] sm:$0xf]
        %v255 = vld [vmem:[%s223 + $0x70] sm:$0xf]
        %v256 = vld [vmem:[%s223 + $0x74] sm:$0xf]
        %v257 = vld [vmem:[%s223 + $0x78] sm:$0xf]
        %v258 = vld [vmem:[%s223 + $0x7c] sm:$0xf]
        %v259 = vld [vmem:[%s1] sm:$0x3]
        %v260 = vld [vmem:[%s2] sm:$0x1]
        %v262 = vlaneseq
        %v263 = vshrl.u32 %v262, 7
        %v264 = vsub.s32 0, %v263
        %v265 = vrot.slane %v260, %v264
        %v299 = vunpack.c.l.b16 %v227
        %v300 = vunpack.c.l.b16 %v228
        %v301 = vunpack.c.l.b16 %v229
        %v302 = vunpack.c.l.b16 %v230
        %v303 = vunpack.c.l.b16 %v231
        %v304 = vunpack.c.l.b16 %v232
        %v305 = vunpack.c.l.b16 %v233
        %v306 = vunpack.c.l.b16 %v234
        %v307 = vunpack.c.l.b16 %v235
        %v308 = vunpack.c.l.b16 %v236
        %v309 = vunpack.c.l.b16 %v237
        %v310 = vunpack.c.l.b16 %v238
        %v311 = vunpack.c.l.b16 %v239
        %v312 = vunpack.c.l.b16 %v240
        %v313 = vunpack.c.l.b16 %v241
        %v314 = vunpack.c.l.b16 %v242
        %v315 = vunpack.c.l.b16 %v243
        %v316 = vunpack.c.l.b16 %v244
        %v317 = vunpack.c.l.b16 %v245
        %v318 = vunpack.c.l.b16 %v246
        %v319 = vunpack.c.l.b16 %v247
        %v320 = vunpack.c.l.b16 %v248
        %v321 = vunpack.c.l.b16 %v249
        %v322 = vunpack.c.l.b16 %v250
        %v323 = vunpack.c.l.b16 %v251
        %v324 = vunpack.c.l.b16 %v252
        %v325 = vunpack.c.l.b16 %v253
        %v326 = vunpack.c.l.b16 %v254
        %v327 = vunpack.c.l.b16 %v255
        %v328 = vunpack.c.l.b16 %v256
        %v329 = vunpack.c.l.b16 %v257
        %v330 = vunpack.c.l.b16 %v258
        %v331 = vpack.c.b16 %v300, %v299
        %v332 = vpack.c.b16 %v302, %v301
        %v333 = vpack.c.b16 %v304, %v303
        %v334 = vpack.c.b16 %v306, %v305
        %v335 = vpack.c.b16 %v308, %v307
        %v336 = vpack.c.b16 %v310, %v309
        %v337 = vpack.c.b16 %v312, %v311
        %v338 = vpack.c.b16 %v314, %v313
        %v339 = vpack.c.b16 %v316, %v315
        %v340 = vpack.c.b16 %v318, %v317
        %v341 = vpack.c.b16 %v320, %v319
        %v342 = vpack.c.b16 %v322, %v321
        %v343 = vpack.c.b16 %v324, %v323
        %v344 = vpack.c.b16 %v326, %v325
        %v345 = vpack.c.b16 %v328, %v327
        %v346 = vpack.c.b16 %v330, %v329
        %vm347 = vcmask 31744
        %v349 = vsel %vm347, %v331, 0
        %v352 = vsel %vm347, %v332, 0
        %v355 = vsel %vm347, %v333, 0
        %v358 = vsel %vm347, %v334, 0
        %v361 = vsel %vm347, %v335, 0
        %v364 = vsel %vm347, %v336, 0
        %v367 = vsel %vm347, %v337, 0
        %v370 = vsel %vm347, %v338, 0
        %v373 = vsel %vm347, %v339, 0
        %v376 = vsel %vm347, %v340, 0
        %v379 = vsel %vm347, %v341, 0
        %v382 = vsel %vm347, %v342, 0
        %v385 = vsel %vm347, %v343, 0
        %v388 = vsel %vm347, %v344, 0
        %v391 = vsel %vm347, %v345, 0
        %v394 = vsel %vm347, %v346, 0
        %vm396 = vcmask 1041408
        %v398 = vsel %vm396, %v259, 0
        %400 = vmatprep.subr.bf16.mxu0 0
        %401 = vmatpush1.bf16.msra.mxu0 %v398
        %402 = vmatprep.subr.bf16.mxu0 0
        %403 = vmatpush1.bf16.msra.mxu0 0
        %404 = vmatprep.subr.bf16.mxu0 0
        %405 = vmatpush1.bf16.msra.mxu0 0
        %406 = vmatprep.subr.bf16.mxu0 0
        %407 = vmatpush1.bf16.msra.mxu0 0
        %408 = vmatprep.subr.bf16.mxu0 0
        %409 = vmatpush1.bf16.msra.mxu0 0
        %410 = vmatprep.subr.bf16.mxu0 0
        %411 = vmatpush1.bf16.msra.mxu0 0
        %412 = vmatprep.subr.bf16.mxu0 0
        %413 = vmatpush1.bf16.msra.mxu0 0
        %414 = vmatprep.subr.bf16.mxu0 0
        %415 = vmatpush1.bf16.msra.mxu0 0
        %416 = vmatprep.subr.bf16.mxu0 0
        %417 = vmatpush1.bf16.msra.mxu0 0
        %418 = vmatprep.subr.bf16.mxu0 0
        %419 = vmatpush1.bf16.msra.mxu0 0
        %420 = vmatprep.subr.bf16.mxu0 0
        %421 = vmatpush1.bf16.msra.mxu0 0
        %422 = vmatprep.subr.bf16.mxu0 0
        %423 = vmatpush1.bf16.msra.mxu0 0
        %424 = vmatprep.subr.bf16.mxu0 0
        %425 = vmatpush1.bf16.msra.mxu0 0
        %426 = vmatprep.subr.bf16.mxu0 0
        %427 = vmatpush1.bf16.msra.mxu0 0
        %428 = vmatprep.subr.bf16.mxu0 0
        %429 = vmatpush1.bf16.msra.mxu0 0
        %430 = vmatprep.subr.bf16.mxu0 0
        %431 = vmatpush1.bf16.msra.mxu0 0
        %432 = vmatprep.mubr.bf16.mxu0 0
        %433 = vmatmul.mubr.bf16.gmra.mrb[0].mxu0 %v349
        %v434 = vpop.f32.mrb[0].mxu0
        %v435 = vadd.f32 %v265, %v434
        %v436 = vpop.f32.mrb[0].mxu0
        %v437 = vpop.f32.mrb[0].mxu0
        %v438 = vadd.f32 %v265, %v437
        %v439 = vpop.f32.mrb[0].mxu0
        %440 = vmatprep.mubr.bf16.mxu0 0
        %441 = vmatmul.mubr.bf16.gmra.mrb[0].mxu0 %v352
        %v442 = vpop.f32.mrb[0].mxu0
        %v443 = vadd.f32 %v265, %v442
        %v444 = vpop.f32.mrb[0].mxu0
        %v445 = vpop.f32.mrb[0].mxu0
        %v446 = vadd.f32 %v265, %v445
        %v447 = vpop.f32.mrb[0].mxu0
        %448 = vmatprep.mubr.bf16.mxu0 0
        %449 = vmatmul.mubr.bf16.gmra.mrb[0].mxu0 %v355
        %v450 = vpop.f32.mrb[0].mxu0
        %v451 = vadd.f32 %v265, %v450
        %v452 = vpop.f32.mrb[0].mxu0
        %v453 = vpop.f32.mrb[0].mxu0
        %v454 = vadd.f32 %v265, %v453
        %v455 = vpop.f32.mrb[0].mxu0
        %456 = vmatprep.mubr.bf16.mxu0 0
        %457 = vmatmul.mubr.bf16.gmra.mrb[0].mxu0 %v358
        %v458 = vpop.f32.mrb[0].mxu0
        %v459 = vadd.f32 %v265, %v458
        %v460 = vpop.f32.mrb[0].mxu0
        %v461 = vpop.f32.mrb[0].mxu0
        %v462 = vadd.f32 %v265, %v461
        %v463 = vpop.f32.mrb[0].mxu0
        %464 = vmatprep.mubr.bf16.mxu0 0
        %465 = vmatmul.mubr.bf16.gmra.mrb[0].mxu0 %v361
        %v466 = vpop.f32.mrb[0].mxu0
        %v467 = vadd.f32 %v265, %v466
        %v468 = vpop.f32.mrb[0].mxu0
        %v469 = vpop.f32.mrb[0].mxu0
        %v470 = vadd.f32 %v265, %v469
        %v471 = vpop.f32.mrb[0].mxu0
        %472 = vmatprep.mubr.bf16.mxu0 0
        %473 = vmatmul.mubr.bf16.gmra.mrb[0].mxu0 %v364
        %v474 = vpop.f32.mrb[0].mxu0
        %v475 = vadd.f32 %v265, %v474
        %v476 = vpop.f32.mrb[0].mxu0
        %v477 = vpop.f32.mrb[0].mxu0
        %v478 = vadd.f32 %v265, %v477
        %v479 = vpop.f32.mrb[0].mxu0
        %480 = vmatprep.mubr.bf16.mxu0 0
        %481 = vmatmul.mubr.bf16.gmra.mrb[0].mxu0 %v367
        %v482 = vpop.f32.mrb[0].mxu0
        %v483 = vadd.f32 %v265, %v482
        %v484 = vpop.f32.mrb[0].mxu0
        %v485 = vpop.f32.mrb[0].mxu0
        %v486 = vadd.f32 %v265, %v485
        %v487 = vpop.f32.mrb[0].mxu0
        %488 = vmatprep.mubr.bf16.mxu0 0
        %489 = vmatmul.mubr.bf16.gmra.mrb[0].mxu0 %v370
        %v490 = vpop.f32.mrb[0].mxu0
        %v491 = vadd.f32 %v265, %v490
        %v492 = vpop.f32.mrb[0].mxu0
        %v493 = vpop.f32.mrb[0].mxu0
        %v494 = vadd.f32 %v265, %v493
        %v495 = vpop.f32.mrb[0].mxu0
        %496 = vmatprep.mubr.bf16.mxu0 0
        %497 = vmatmul.mubr.bf16.gmra.mrb[0].mxu0 %v373
        %v498 = vpop.f32.mrb[0].mxu0
        %v499 = vadd.f32 %v265, %v498
        %v500 = vpop.f32.mrb[0].mxu0
        %v501 = vpop.f32.mrb[0].mxu0
        %v502 = vadd.f32 %v265, %v501
        %v503 = vpop.f32.mrb[0].mxu0
        %504 = vmatprep.mubr.bf16.mxu0 0
        %505 = vmatmul.mubr.bf16.gmra.mrb[0].mxu0 %v376
        %v506 = vpop.f32.mrb[0].mxu0
        %v507 = vadd.f32 %v265, %v506
        %v508 = vpop.f32.mrb[0].mxu0
        %v509 = vpop.f32.mrb[0].mxu0
        %v510 = vadd.f32 %v265, %v509
        %v511 = vpop.f32.mrb[0].mxu0
        %512 = vmatprep.mubr.bf16.mxu0 0
        %513 = vmatmul.mubr.bf16.gmra.mrb[0].mxu0 %v379
        %v514 = vpop.f32.mrb[0].mxu0
        %v515 = vadd.f32 %v265, %v514
        %v516 = vpop.f32.mrb[0].mxu0
        %v517 = vpop.f32.mrb[0].mxu0
        %v518 = vadd.f32 %v265, %v517
        %v519 = vpop.f32.mrb[0].mxu0
        %520 = vmatprep.mubr.bf16.mxu0 0
        %521 = vmatmul.mubr.bf16.gmra.mrb[0].mxu0 %v382
        %v522 = vpop.f32.mrb[0].mxu0
        %v523 = vadd.f32 %v265, %v522
        %v524 = vpop.f32.mrb[0].mxu0
        %v525 = vpop.f32.mrb[0].mxu0
        %v526 = vadd.f32 %v265, %v525
        %v527 = vpop.f32.mrb[0].mxu0
        %528 = vmatprep.mubr.bf16.mxu0 0
        %529 = vmatmul.mubr.bf16.gmra.mrb[0].mxu0 %v385
        %v530 = vpop.f32.mrb[0].mxu0
        %v531 = vadd.f32 %v265, %v530
        %v532 = vpop.f32.mrb[0].mxu0
        %v533 = vpop.f32.mrb[0].mxu0
        %v534 = vadd.f32 %v265, %v533
        %v535 = vpop.f32.mrb[0].mxu0
        %536 = vmatprep.mubr.bf16.mxu0 0
        %537 = vmatmul.mubr.bf16.gmra.mrb[0].mxu0 %v388
        %v538 = vpop.f32.mrb[0].mxu0
        %v539 = vadd.f32 %v265, %v538
        %v540 = vpop.f32.mrb[0].mxu0
        %v541 = vpop.f32.mrb[0].mxu0
        %v542 = vadd.f32 %v265, %v541
        %v543 = vpop.f32.mrb[0].mxu0
        %544 = vmatprep.mubr.bf16.mxu0 0
        %545 = vmatmul.mubr.bf16.gmra.mrb[0].mxu0 %v391
        %v546 = vpop.f32.mrb[0].mxu0
        %v547 = vadd.f32 %v265, %v546
        %v548 = vpop.f32.mrb[0].mxu0
        %v549 = vpop.f32.mrb[0].mxu0
        %v550 = vadd.f32 %v265, %v549
        %v551 = vpop.f32.mrb[0].mxu0
        %552 = vmatprep.mubr.bf16.mxu0 0
        %553 = vmatmul.mubr.bf16.gmra.mrb[0].mxu0 %v394
        %v554 = vpop.f32.mrb[0].mxu0
        %v555 = vadd.f32 %v265, %v554
        %v556 = vpop.f32.mrb[0].mxu0
        %v557 = vpop.f32.mrb[0].mxu0
        %v558 = vadd.f32 %v265, %v557
        %v559 = vpop.f32.mrb[0].mxu0
        %560 = vdwg.mxu0
        %v561 = vmax.f32 %v435, 0.0
        %v562 = vmax.f32 %v438, 0.0
        %v563 = vmax.f32 %v443, 0.0
        %v564 = vmax.f32 %v446, 0.0
        %v565 = vmax.f32 %v451, 0.0
        %v566 = vmax.f32 %v454, 0.0
        %v567 = vmax.f32 %v459, 0.0
        %v568 = vmax.f32 %v462, 0.0
        %v569 = vmax.f32 %v467, 0.0
        %v570 = vmax.f32 %v470, 0.0
        %v571 = vmax.f32 %v475, 0.0
        %v572 = vmax.f32 %v478, 0.0
        %v573 = vmax.f32 %v483, 0.0
        %v574 = vmax.f32 %v486, 0.0
        %v575 = vmax.f32 %v491, 0.0
        %v576 = vmax.f32 %v494, 0.0
        %v577 = vmax.f32 %v499, 0.0
        %v578 = vmax.f32 %v502, 0.0
        %v579 = vmax.f32 %v507, 0.0
        %v580 = vmax.f32 %v510, 0.0
        %v581 = vmax.f32 %v515, 0.0
        %v582 = vmax.f32 %v518, 0.0
        %v583 = vmax.f32 %v523, 0.0
        %v584 = vmax.f32 %v526, 0.0
        %v585 = vmax.f32 %v531, 0.0
        %v586 = vmax.f32 %v534, 0.0
        %v587 = vmax.f32 %v539, 0.0
        %v588 = vmax.f32 %v542, 0.0
        %v589 = vmax.f32 %v547, 0.0
        %v590 = vmax.f32 %v550, 0.0
        %v591 = vmax.f32 %v555, 0.0
        %v592 = vmax.f32 %v558, 0.0
        %v593 = vpack.c.bf16 %v562, %v561
        %v594 = vpack.c.bf16 %v564, %v563
        %v595 = vpack.c.bf16 %v566, %v565
        %v596 = vpack.c.bf16 %v568, %v567
        %v597 = vpack.c.bf16 %v570, %v569
        %v598 = vpack.c.bf16 %v572, %v571
        %v599 = vpack.c.bf16 %v574, %v573
        %v600 = vpack.c.bf16 %v576, %v575
        %v601 = vpack.c.bf16 %v578, %v577
        %v602 = vpack.c.bf16 %v580, %v579
        %v603 = vpack.c.bf16 %v582, %v581
        %v604 = vpack.c.bf16 %v584, %v583
        %v605 = vpack.c.bf16 %v586, %v585
        %v606 = vpack.c.bf16 %v588, %v587
        %v607 = vpack.c.bf16 %v590, %v589
        %v608 = vpack.c.bf16 %v592, %v591
        %v609 = vld [vmem:[%s3] sm:$0xf]
        %v610 = vld [vmem:[%s3 + $0x4] sm:$0xf]
        %v611 = vld [vmem:[%s3 + $0x8] sm:$0xf]
        %v612 = vld [vmem:[%s3 + $0xc] sm:$0xf]
        %v617 = vunpack.c.l.b16 %v609
        %v618 = vunpack.c.l.b16 %v610
        %v619 = vunpack.c.l.b16 %v611
        %v620 = vunpack.c.l.b16 %v612
        %v621 = vpack.c.b16 %v618, %v617
        %v622 = vpack.c.b16 %v620, %v619
        %vm625 = vcmask 261120
        %v627 = vsel %vm625, %v593, 0
        %v630 = vsel %vm625, %v594, 0
        %v633 = vsel %vm625, %v595, 0
        %v636 = vsel %vm625, %v596, 0
        %v639 = vsel %vm625, %v597, 0
        %v642 = vsel %vm625, %v598, 0
        %v645 = vsel %vm625, %v599, 0
        %v648 = vsel %vm625, %v600, 0
        %v651 = vsel %vm625, %v601, 0
        %v654 = vsel %vm625, %v602, 0
        %v657 = vsel %vm625, %v603, 0
        %v660 = vsel %vm625, %v604, 0
        %v663 = vsel %vm625, %v605, 0
        %v666 = vsel %vm625, %v606, 0
        %v669 = vsel %vm625, %v607, 0
        %v672 = vsel %vm625, %v608, 0
        %674 = vmatprep.subr.bf16.mxu0 0
        %675 = vmatpush1.bf16.msra.mxu0 %v621
        %676 = vmatprep.subr.bf16.mxu0 0
        %677 = vmatpush1.bf16.msra.mxu0 %v622
        %678 = vmatprep.subr.bf16.mxu0 0
        %679 = vmatpush1.bf16.msra.mxu0 0
        %680 = vmatprep.subr.bf16.mxu0 0
        %681 = vmatpush1.bf16.msra.mxu0 0
        %682 = vmatprep.subr.bf16.mxu0 0
        %683 = vmatpush1.bf16.msra.mxu0 0
        %684 = vmatprep.subr.bf16.mxu0 0
        %685 = vmatpush1.bf16.msra.mxu0 0
        %686 = vmatprep.subr.bf16.mxu0 0
        %687 = vmatpush1.bf16.msra.mxu0 0
        %688 = vmatprep.subr.bf16.mxu0 0
        %689 = vmatpush1.bf16.msra.mxu0 0
        %690 = vmatprep.subr.bf16.mxu0 0
        %691 = vmatpush1.bf16.msra.mxu0 0
        %692 = vmatprep.subr.bf16.mxu0 0
        %693 = vmatpush1.bf16.msra.mxu0 0
        %694 = vmatprep.subr.bf16.mxu0 0
        %695 = vmatpush1.bf16.msra.mxu0 0
        %696 = vmatprep.subr.bf16.mxu0 0
        %697 = vmatpush1.bf16.msra.mxu0 0
        %698 = vmatprep.subr.bf16.mxu0 0
        %699 = vmatpush1.bf16.msra.mxu0 0
        %700 = vmatprep.subr.bf16.mxu0 0
        %701 = vmatpush1.bf16.msra.mxu0 0
        %702 = vmatprep.subr.bf16.mxu0 0
        %703 = vmatpush1.bf16.msra.mxu0 0
        %704 = vmatprep.subr.bf16.mxu0 0
        %705 = vmatpush1.bf16.msra.mxu0 0
        %706 = vmatprep.mubr.bf16.mxu0 0
        %707 = vmatmul.mubr.bf16.gmra.mrb[0].mxu0 %v627
        %v708 = vpop.f32.mrb[0].mxu0
        %v709 = vadd.f32 0.0, %v708
        %v710 = vpop.f32.mrb[0].mxu0
        %v711 = vpop.f32.mrb[0].mxu0
        %v712 = vadd.f32 0.0, %v711
        %v713 = vpop.f32.mrb[0].mxu0
        %714 = vmatprep.mubr.bf16.mxu0 0
        %715 = vmatmul.mubr.bf16.gmra.mrb[0].mxu0 %v630
        %v716 = vpop.f32.mrb[0].mxu0
        %v717 = vadd.f32 0.0, %v716
        %v718 = vpop.f32.mrb[0].mxu0
        %v719 = vpop.f32.mrb[0].mxu0
        %v720 = vadd.f32 0.0, %v719
        %v721 = vpop.f32.mrb[0].mxu0
        %722 = vmatprep.mubr.bf16.mxu0 0
        %723 = vmatmul.mubr.bf16.gmra.mrb[0].mxu0 %v633
        %v724 = vpop.f32.mrb[0].mxu0
        %v725 = vadd.f32 0.0, %v724
        %v726 = vpop.f32.mrb[0].mxu0
        %v727 = vpop.f32.mrb[0].mxu0
        %v728 = vadd.f32 0.0, %v727
        %v729 = vpop.f32.mrb[0].mxu0
        %730 = vmatprep.mubr.bf16.mxu0 0
        %731 = vmatmul.mubr.bf16.gmra.mrb[0].mxu0 %v636
        %v732 = vpop.f32.mrb[0].mxu0
        %v733 = vadd.f32 0.0, %v732
        %v734 = vpop.f32.mrb[0].mxu0
        %v735 = vpop.f32.mrb[0].mxu0
        %v736 = vadd.f32 0.0, %v735
        %v737 = vpop.f32.mrb[0].mxu0
        %738 = vmatprep.mubr.bf16.mxu0 0
        %739 = vmatmul.mubr.bf16.gmra.mrb[0].mxu0 %v639
        %v740 = vpop.f32.mrb[0].mxu0
        %v741 = vadd.f32 0.0, %v740
        %v742 = vpop.f32.mrb[0].mxu0
        %v743 = vpop.f32.mrb[0].mxu0
        %v744 = vadd.f32 0.0, %v743
        %v745 = vpop.f32.mrb[0].mxu0
        %746 = vmatprep.mubr.bf16.mxu0 0
        %747 = vmatmul.mubr.bf16.gmra.mrb[0].mxu0 %v642
        %v748 = vpop.f32.mrb[0].mxu0
        %v749 = vadd.f32 0.0, %v748
        %v750 = vpop.f32.mrb[0].mxu0
        %v751 = vpop.f32.mrb[0].mxu0
        %v752 = vadd.f32 0.0, %v751
        %v753 = vpop.f32.mrb[0].mxu0
        %754 = vmatprep.mubr.bf16.mxu0 0
        %755 = vmatmul.mubr.bf16.gmra.mrb[0].mxu0 %v645
        %v756 = vpop.f32.mrb[0].mxu0
        %v757 = vadd.f32 0.0, %v756
        %v758 = vpop.f32.mrb[0].mxu0
        %v759 = vpop.f32.mrb[0].mxu0
        %v760 = vadd.f32 0.0, %v759
        %v761 = vpop.f32.mrb[0].mxu0
        %762 = vmatprep.mubr.bf16.mxu0 0
        %763 = vmatmul.mubr.bf16.gmra.mrb[0].mxu0 %v648
        %v764 = vpop.f32.mrb[0].mxu0
        %v765 = vadd.f32 0.0, %v764
        %v766 = vpop.f32.mrb[0].mxu0
        %v767 = vpop.f32.mrb[0].mxu0
        %v768 = vadd.f32 0.0, %v767
        %v769 = vpop.f32.mrb[0].mxu0
        %770 = vmatprep.mubr.bf16.mxu0 0
        %771 = vmatmul.mubr.bf16.gmra.mrb[0].mxu0 %v651
        %v772 = vpop.f32.mrb[0].mxu0
        %v773 = vadd.f32 0.0, %v772
        %v774 = vpop.f32.mrb[0].mxu0
        %v775 = vpop.f32.mrb[0].mxu0
        %v776 = vadd.f32 0.0, %v775
        %v777 = vpop.f32.mrb[0].mxu0
        %778 = vmatprep.mubr.bf16.mxu0 0
        %779 = vmatmul.mubr.bf16.gmra.mrb[0].mxu0 %v654
        %v780 = vpop.f32.mrb[0].mxu0
        %v781 = vadd.f32 0.0, %v780
        %v782 = vpop.f32.mrb[0].mxu0
        %v783 = vpop.f32.mrb[0].mxu0
        %v784 = vadd.f32 0.0, %v783
        %v785 = vpop.f32.mrb[0].mxu0
        %786 = vmatprep.mubr.bf16.mxu0 0
        %787 = vmatmul.mubr.bf16.gmra.mrb[0].mxu0 %v657
        %v788 = vpop.f32.mrb[0].mxu0
        %v789 = vadd.f32 0.0, %v788
        %v790 = vpop.f32.mrb[0].mxu0
        %v791 = vpop.f32.mrb[0].mxu0
        %v792 = vadd.f32 0.0, %v791
        %v793 = vpop.f32.mrb[0].mxu0
        %794 = vmatprep.mubr.bf16.mxu0 0
        %795 = vmatmul.mubr.bf16.gmra.mrb[0].mxu0 %v660
        %v796 = vpop.f32.mrb[0].mxu0
        %v797 = vadd.f32 0.0, %v796
        %v798 = vpop.f32.mrb[0].mxu0
        %v799 = vpop.f32.mrb[0].mxu0
        %v800 = vadd.f32 0.0, %v799
        %v801 = vpop.f32.mrb[0].mxu0
        %802 = vmatprep.mubr.bf16.mxu0 0
        %803 = vmatmul.mubr.bf16.gmra.mrb[0].mxu0 %v663
        %v804 = vpop.f32.mrb[0].mxu0
        %v805 = vadd.f32 0.0, %v804
        %v806 = vpop.f32.mrb[0].mxu0
        %v807 = vpop.f32.mrb[0].mxu0
        %v808 = vadd.f32 0.0, %v807
        %v809 = vpop.f32.mrb[0].mxu0
        %810 = vmatprep.mubr.bf16.mxu0 0
        %811 = vmatmul.mubr.bf16.gmra.mrb[0].mxu0 %v666
        %v812 = vpop.f32.mrb[0].mxu0
        %v813 = vadd.f32 0.0, %v812
        %v814 = vpop.f32.mrb[0].mxu0
        %v815 = vpop.f32.mrb[0].mxu0
        %v816 = vadd.f32 0.0, %v815
        %v817 = vpop.f32.mrb[0].mxu0
        %818 = vmatprep.mubr.bf16.mxu0 0
        %819 = vmatmul.mubr.bf16.gmra.mrb[0].mxu0 %v669
        %v820 = vpop.f32.mrb[0].mxu0
        %v821 = vadd.f32 0.0, %v820
        %v822 = vpop.f32.mrb[0].mxu0
        %v823 = vpop.f32.mrb[0].mxu0
        %v824 = vadd.f32 0.0, %v823
        %v825 = vpop.f32.mrb[0].mxu0
        %826 = vmatprep.mubr.bf16.mxu0 0
        %827 = vmatmul.mubr.bf16.gmra.mrb[0].mxu0 %v672
        %v828 = vpop.f32.mrb[0].mxu0
        %v829 = vadd.f32 0.0, %v828
        %v830 = vpop.f32.mrb[0].mxu0
        %v831 = vpop.f32.mrb[0].mxu0
        %v832 = vadd.f32 0.0, %v831
        %v833 = vpop.f32.mrb[0].mxu0
        %834 = vdwg.mxu0
        %851 = vrot.lane.b32.xlu0 %v593, 96
        %v852 = vpop.permute.xlu0 %851
        %853 = vrot.lane.b32.xlu0 %v594, 96
        %v854 = vpop.permute.xlu0 %853
        %855 = vrot.lane.b32.xlu0 %v595, 96
        %v856 = vpop.permute.xlu0 %855
        %857 = vrot.lane.b32.xlu0 %v596, 96
        %v858 = vpop.permute.xlu0 %857
        %859 = vrot.lane.b32.xlu0 %v597, 96
        %v860 = vpop.permute.xlu0 %859
        %861 = vrot.lane.b32.xlu0 %v598, 96
        %v862 = vpop.permute.xlu0 %861
        %863 = vrot.lane.b32.xlu0 %v599, 96
        %v864 = vpop.permute.xlu0 %863
        %865 = vrot.lane.b32.xlu0 %v600, 96
        %v866 = vpop.permute.xlu0 %865
        %867 = vrot.lane.b32.xlu0 %v601, 96
        %v868 = vpop.permute.xlu0 %867
        %869 = vrot.lane.b32.xlu0 %v602, 96
        %v870 = vpop.permute.xlu0 %869
        %871 = vrot.lane.b32.xlu0 %v603, 96
        %v872 = vpop.permute.xlu0 %871
        %873 = vrot.lane.b32.xlu0 %v604, 96
        %v874 = vpop.permute.xlu0 %873
        %875 = vrot.lane.b32.xlu0 %v605, 96
        %v876 = vpop.permute.xlu0 %875
        %877 = vrot.lane.b32.xlu0 %v606, 96
        %v878 = vpop.permute.xlu0 %877
        %879 = vrot.lane.b32.xlu0 %v607, 96
        %v880 = vpop.permute.xlu0 %879
        %881 = vrot.lane.b32.xlu0 %v608, 96
        %v882 = vpop.permute.xlu0 %881
        %v884 = vsel %vm625, %v852, 0
        %v887 = vsel %vm625, %v854, 0
        %v890 = vsel %vm625, %v856, 0
        %v893 = vsel %vm625, %v858, 0
        %v896 = vsel %vm625, %v860, 0
        %v899 = vsel %vm625, %v862, 0
        %v902 = vsel %vm625, %v864, 0
        %v905 = vsel %vm625, %v866, 0
        %v908 = vsel %vm625, %v868, 0
        %v911 = vsel %vm625, %v870, 0
        %v914 = vsel %vm625, %v872, 0
        %v917 = vsel %vm625, %v874, 0
        %v920 = vsel %vm625, %v876, 0
        %v923 = vsel %vm625, %v878, 0
        %v926 = vsel %vm625, %v880, 0
        %v929 = vsel %vm625, %v882, 0
        %931 = vmatprep.subr.bf16.mxu0 0
        %932 = vmatpush1.bf16.msra.mxu0 %v621
        %933 = vmatprep.subr.bf16.mxu0 0
        %934 = vmatpush1.bf16.msra.mxu0 %v622
        %935 = vmatprep.subr.bf16.mxu0 0
        %936 = vmatpush1.bf16.msra.mxu0 0
        %937 = vmatprep.subr.bf16.mxu0 0
        %938 = vmatpush1.bf16.msra.mxu0 0
        %939 = vmatprep.subr.bf16.mxu0 0
        %940 = vmatpush1.bf16.msra.mxu0 0
        %941 = vmatprep.subr.bf16.mxu0 0
        %942 = vmatpush1.bf16.msra.mxu0 0
        %943 = vmatprep.subr.bf16.mxu0 0
        %944 = vmatpush1.bf16.msra.mxu0 0
        %945 = vmatprep.subr.bf16.mxu0 0
        %946 = vmatpush1.bf16.msra.mxu0 0
        %947 = vmatprep.subr.bf16.mxu0 0
        %948 = vmatpush1.bf16.msra.mxu0 0
        %949 = vmatprep.subr.bf16.mxu0 0
        %950 = vmatpush1.bf16.msra.mxu0 0
        %951 = vmatprep.subr.bf16.mxu0 0
        %952 = vmatpush1.bf16.msra.mxu0 0
        %953 = vmatprep.subr.bf16.mxu0 0
        %954 = vmatpush1.bf16.msra.mxu0 0
        %955 = vmatprep.subr.bf16.mxu0 0
        %956 = vmatpush1.bf16.msra.mxu0 0
        %957 = vmatprep.subr.bf16.mxu0 0
        %958 = vmatpush1.bf16.msra.mxu0 0
        %959 = vmatprep.subr.bf16.mxu0 0
        %960 = vmatpush1.bf16.msra.mxu0 0
        %961 = vmatprep.subr.bf16.mxu0 0
        %962 = vmatpush1.bf16.msra.mxu0 0
        %963 = vmatprep.mubr.bf16.mxu0 0
        %964 = vmatmul.mubr.bf16.gmra.mrb[0].mxu0 %v884
        %v965 = vpop.f32.mrb[0].mxu0
        %v966 = vadd.f32 0.0, %v965
        %v967 = vpop.f32.mrb[0].mxu0
        %v968 = vpop.f32.mrb[0].mxu0
        %v969 = vadd.f32 0.0, %v968
        %v970 = vpop.f32.mrb[0].mxu0
        %971 = vmatprep.mubr.bf16.mxu0 0
        %972 = vmatmul.mubr.bf16.gmra.mrb[0].mxu0 %v887
        %v973 = vpop.f32.mrb[0].mxu0
        %v974 = vadd.f32 0.0, %v973
        %v975 = vpop.f32.mrb[0].mxu0
        %v976 = vpop.f32.mrb[0].mxu0
        %v977 = vadd.f32 0.0, %v976
        %v978 = vpop.f32.mrb[0].mxu0
        %979 = vmatprep.mubr.bf16.mxu0 0
        %980 = vmatmul.mubr.bf16.gmra.mrb[0].mxu0 %v890
        %v981 = vpop.f32.mrb[0].mxu0
        %v982 = vadd.f32 0.0, %v981
        %v983 = vpop.f32.mrb[0].mxu0
        %v984 = vpop.f32.mrb[0].mxu0
        %v985 = vadd.f32 0.0, %v984
        %v986 = vpop.f32.mrb[0].mxu0
        %987 = vmatprep.mubr.bf16.mxu0 0
        %988 = vmatmul.mubr.bf16.gmra.mrb[0].mxu0 %v893
        %v989 = vpop.f32.mrb[0].mxu0
        %v990 = vadd.f32 0.0, %v989
        %v991 = vpop.f32.mrb[0].mxu0
        %v992 = vpop.f32.mrb[0].mxu0
        %v993 = vadd.f32 0.0, %v992
        %v994 = vpop.f32.mrb[0].mxu0
        %995 = vmatprep.mubr.bf16.mxu0 0
        %996 = vmatmul.mubr.bf16.gmra.mrb[0].mxu0 %v896
        %v997 = vpop.f32.mrb[0].mxu0
        %v998 = vadd.f32 0.0, %v997
        %v999 = vpop.f32.mrb[0].mxu0
        %v1000 = vpop.f32.mrb[0].mxu0
        %v1001 = vadd.f32 0.0, %v1000
        %v1002 = vpop.f32.mrb[0].mxu0
        %1003 = vmatprep.mubr.bf16.mxu0 0
        %1004 = vmatmul.mubr.bf16.gmra.mrb[0].mxu0 %v899
        %v1005 = vpop.f32.mrb[0].mxu0
        %v1006 = vadd.f32 0.0, %v1005
        %v1007 = vpop.f32.mrb[0].mxu0
        %v1008 = vpop.f32.mrb[0].mxu0
        %v1009 = vadd.f32 0.0, %v1008
        %v1010 = vpop.f32.mrb[0].mxu0
        %1011 = vmatprep.mubr.bf16.mxu0 0
        %1012 = vmatmul.mubr.bf16.gmra.mrb[0].mxu0 %v902
        %v1013 = vpop.f32.mrb[0].mxu0
        %v1014 = vadd.f32 0.0, %v1013
        %v1015 = vpop.f32.mrb[0].mxu0
        %v1016 = vpop.f32.mrb[0].mxu0
        %v1017 = vadd.f32 0.0, %v1016
        %v1018 = vpop.f32.mrb[0].mxu0
        %1019 = vmatprep.mubr.bf16.mxu0 0
        %1020 = vmatmul.mubr.bf16.gmra.mrb[0].mxu0 %v905
        %v1021 = vpop.f32.mrb[0].mxu0
        %v1022 = vadd.f32 0.0, %v1021
        %v1023 = vpop.f32.mrb[0].mxu0
        %v1024 = vpop.f32.mrb[0].mxu0
        %v1025 = vadd.f32 0.0, %v1024
        %v1026 = vpop.f32.mrb[0].mxu0
        %1027 = vmatprep.mubr.bf16.mxu0 0
        %1028 = vmatmul.mubr.bf16.gmra.mrb[0].mxu0 %v908
        %v1029 = vpop.f32.mrb[0].mxu0
        %v1030 = vadd.f32 0.0, %v1029
        %v1031 = vpop.f32.mrb[0].mxu0
        %v1032 = vpop.f32.mrb[0].mxu0
        %v1033 = vadd.f32 0.0, %v1032
        %v1034 = vpop.f32.mrb[0].mxu0
        %1035 = vmatprep.mubr.bf16.mxu0 0
        %1036 = vmatmul.mubr.bf16.gmra.mrb[0].mxu0 %v911
        %v1037 = vpop.f32.mrb[0].mxu0
        %v1038 = vadd.f32 0.0, %v1037
        %v1039 = vpop.f32.mrb[0].mxu0
        %v1040 = vpop.f32.mrb[0].mxu0
        %v1041 = vadd.f32 0.0, %v1040
        %v1042 = vpop.f32.mrb[0].mxu0
        %1043 = vmatprep.mubr.bf16.mxu0 0
        %1044 = vmatmul.mubr.bf16.gmra.mrb[0].mxu0 %v914
        %v1045 = vpop.f32.mrb[0].mxu0
        %v1046 = vadd.f32 0.0, %v1045
        %v1047 = vpop.f32.mrb[0].mxu0
        %v1048 = vpop.f32.mrb[0].mxu0
        %v1049 = vadd.f32 0.0, %v1048
        %v1050 = vpop.f32.mrb[0].mxu0
        %1051 = vmatprep.mubr.bf16.mxu0 0
        %1052 = vmatmul.mubr.bf16.gmra.mrb[0].mxu0 %v917
        %v1053 = vpop.f32.mrb[0].mxu0
        %v1054 = vadd.f32 0.0, %v1053
        %v1055 = vpop.f32.mrb[0].mxu0
        %v1056 = vpop.f32.mrb[0].mxu0
        %v1057 = vadd.f32 0.0, %v1056
        %v1058 = vpop.f32.mrb[0].mxu0
        %1059 = vmatprep.mubr.bf16.mxu0 0
        %1060 = vmatmul.mubr.bf16.gmra.mrb[0].mxu0 %v920
        %v1061 = vpop.f32.mrb[0].mxu0
        %v1062 = vadd.f32 0.0, %v1061
        %v1063 = vpop.f32.mrb[0].mxu0
        %v1064 = vpop.f32.mrb[0].mxu0
        %v1065 = vadd.f32 0.0, %v1064
        %v1066 = vpop.f32.mrb[0].mxu0
        %1067 = vmatprep.mubr.bf16.mxu0 0
        %1068 = vmatmul.mubr.bf16.gmra.mrb[0].mxu0 %v923
        %v1069 = vpop.f32.mrb[0].mxu0
        %v1070 = vadd.f32 0.0, %v1069
        %v1071 = vpop.f32.mrb[0].mxu0
        %v1072 = vpop.f32.mrb[0].mxu0
        %v1073 = vadd.f32 0.0, %v1072
        %v1074 = vpop.f32.mrb[0].mxu0
        %1075 = vmatprep.mubr.bf16.mxu0 0
        %1076 = vmatmul.mubr.bf16.gmra.mrb[0].mxu0 %v926
        %v1077 = vpop.f32.mrb[0].mxu0
        %v1078 = vadd.f32 0.0, %v1077
        %v1079 = vpop.f32.mrb[0].mxu0
        %v1080 = vpop.f32.mrb[0].mxu0
        %v1081 = vadd.f32 0.0, %v1080
        %v1082 = vpop.f32.mrb[0].mxu0
        %1083 = vmatprep.mubr.bf16.mxu0 0
        %1084 = vmatmul.mubr.bf16.gmra.mrb[0].mxu0 %v929
        %v1085 = vpop.f32.mrb[0].mxu0
        %v1086 = vadd.f32 0.0, %v1085
        %v1087 = vpop.f32.mrb[0].mxu0
        %v1088 = vpop.f32.mrb[0].mxu0
        %v1089 = vadd.f32 0.0, %v1088
        %v1090 = vpop.f32.mrb[0].mxu0
        %1091 = vdwg.mxu0
        %1092 = vrot.lane.b32.xlu0 %v593, 64
        %v1093 = vpop.permute.xlu0 %1092
        %1094 = vrot.lane.b32.xlu0 %v594, 64
        %v1095 = vpop.permute.xlu0 %1094
        %1096 = vrot.lane.b32.xlu0 %v595, 64
        %v1097 = vpop.permute.xlu0 %1096
        %1098 = vrot.lane.b32.xlu0 %v596, 64
        %v1099 = vpop.permute.xlu0 %1098
        %1100 = vrot.lane.b32.xlu0 %v597, 64
        %v1101 = vpop.permute.xlu0 %1100
        %1102 = vrot.lane.b32.xlu0 %v598, 64
        %v1103 = vpop.permute.xlu0 %1102
        %1104 = vrot.lane.b32.xlu0 %v599, 64
        %v1105 = vpop.permute.xlu0 %1104
        %1106 = vrot.lane.b32.xlu0 %v600, 64
        %v1107 = vpop.permute.xlu0 %1106
        %1108 = vrot.lane.b32.xlu0 %v601, 64
        %v1109 = vpop.permute.xlu0 %1108
        %1110 = vrot.lane.b32.xlu0 %v602, 64
        %v1111 = vpop.permute.xlu0 %1110
        %1112 = vrot.lane.b32.xlu0 %v603, 64
        %v1113 = vpop.permute.xlu0 %1112
        %1114 = vrot.lane.b32.xlu0 %v604, 64
        %v1115 = vpop.permute.xlu0 %1114
        %1116 = vrot.lane.b32.xlu0 %v605, 64
        %v1117 = vpop.permute.xlu0 %1116
        %1118 = vrot.lane.b32.xlu0 %v606, 64
        %v1119 = vpop.permute.xlu0 %1118
        %1120 = vrot.lane.b32.xlu0 %v607, 64
        %v1121 = vpop.permute.xlu0 %1120
        %1122 = vrot.lane.b32.xlu0 %v608, 64
        %v1123 = vpop.permute.xlu0 %1122
        %v1125 = vsel %vm625, %v1093, 0
        %v1128 = vsel %vm625, %v1095, 0
        %v1131 = vsel %vm625, %v1097, 0
        %v1134 = vsel %vm625, %v1099, 0
        %v1137 = vsel %vm625, %v1101, 0
        %v1140 = vsel %vm625, %v1103, 0
        %v1143 = vsel %vm625, %v1105, 0
        %v1146 = vsel %vm625, %v1107, 0
        %v1149 = vsel %vm625, %v1109, 0
        %v1152 = vsel %vm625, %v1111, 0
        %v1155 = vsel %vm625, %v1113, 0
        %v1158 = vsel %vm625, %v1115, 0
        %v1161 = vsel %vm625, %v1117, 0
        %v1164 = vsel %vm625, %v1119, 0
        %v1167 = vsel %vm625, %v1121, 0
        %v1170 = vsel %vm625, %v1123, 0
        %1172 = vmatprep.subr.bf16.mxu0 0
        %1173 = vmatpush1.bf16.msra.mxu0 %v621
        %1174 = vmatprep.subr.bf16.mxu0 0
        %1175 = vmatpush1.bf16.msra.mxu0 %v622
        %1176 = vmatprep.subr.bf16.mxu0 0
        %1177 = vmatpush1.bf16.msra.mxu0 0
        %1178 = vmatprep.subr.bf16.mxu0 0
        %1179 = vmatpush1.bf16.msra.mxu0 0
        %1180 = vmatprep.subr.bf16.mxu0 0
        %1181 = vmatpush1.bf16.msra.mxu0 0
        %1182 = vmatprep.subr.bf16.mxu0 0
        %1183 = vmatpush1.bf16.msra.mxu0 0
        %1184 = vmatprep.subr.bf16.mxu0 0
        %1185 = vmatpush1.bf16.msra.mxu0 0
        %1186 = vmatprep.subr.bf16.mxu0 0
        %1187 = vmatpush1.bf16.msra.mxu0 0
        %1188 = vmatprep.subr.bf16.mxu0 0
        %1189 = vmatpush1.bf16.msra.mxu0 0
        %1190 = vmatprep.subr.bf16.mxu0 0
        %1191 = vmatpush1.bf16.msra.mxu0 0
        %1192 = vmatprep.subr.bf16.mxu0 0
        %1193 = vmatpush1.bf16.msra.mxu0 0
        %1194 = vmatprep.subr.bf16.mxu0 0
        %1195 = vmatpush1.bf16.msra.mxu0 0
        %1196 = vmatprep.subr.bf16.mxu0 0
        %1197 = vmatpush1.bf16.msra.mxu0 0
        %1198 = vmatprep.subr.bf16.mxu0 0
        %1199 = vmatpush1.bf16.msra.mxu0 0
        %1200 = vmatprep.subr.bf16.mxu0 0
        %1201 = vmatpush1.bf16.msra.mxu0 0
        %1202 = vmatprep.subr.bf16.mxu0 0
        %1203 = vmatpush1.bf16.msra.mxu0 0
        %1204 = vmatprep.mubr.bf16.mxu0 0
        %1205 = vmatmul.mubr.bf16.gmra.mrb[0].mxu0 %v1125
        %v1206 = vpop.f32.mrb[0].mxu0
        %v1207 = vadd.f32 0.0, %v1206
        %v1208 = vpop.f32.mrb[0].mxu0
        %v1209 = vpop.f32.mrb[0].mxu0
        %v1210 = vadd.f32 0.0, %v1209
        %v1211 = vpop.f32.mrb[0].mxu0
        %1212 = vmatprep.mubr.bf16.mxu0 0
        %1213 = vmatmul.mubr.bf16.gmra.mrb[0].mxu0 %v1128
        %v1214 = vpop.f32.mrb[0].mxu0
        %v1215 = vadd.f32 0.0, %v1214
        %v1216 = vpop.f32.mrb[0].mxu0
        %v1217 = vpop.f32.mrb[0].mxu0
        %v1218 = vadd.f32 0.0, %v1217
        %v1219 = vpop.f32.mrb[0].mxu0
        %1220 = vmatprep.mubr.bf16.mxu0 0
        %1221 = vmatmul.mubr.bf16.gmra.mrb[0].mxu0 %v1131
        %v1222 = vpop.f32.mrb[0].mxu0
        %v1223 = vadd.f32 0.0, %v1222
        %v1224 = vpop.f32.mrb[0].mxu0
        %v1225 = vpop.f32.mrb[0].mxu0
        %v1226 = vadd.f32 0.0, %v1225
        %v1227 = vpop.f32.mrb[0].mxu0
        %1228 = vmatprep.mubr.bf16.mxu0 0
        %1229 = vmatmul.mubr.bf16.gmra.mrb[0].mxu0 %v1134
        %v1230 = vpop.f32.mrb[0].mxu0
        %v1231 = vadd.f32 0.0, %v1230
        %v1232 = vpop.f32.mrb[0].mxu0
        %v1233 = vpop.f32.mrb[0].mxu0
        %v1234 = vadd.f32 0.0, %v1233
        %v1235 = vpop.f32.mrb[0].mxu0
        %1236 = vmatprep.mubr.bf16.mxu0 0
        %1237 = vmatmul.mubr.bf16.gmra.mrb[0].mxu0 %v1137
        %v1238 = vpop.f32.mrb[0].mxu0
        %v1239 = vadd.f32 0.0, %v1238
        %v1240 = vpop.f32.mrb[0].mxu0
        %v1241 = vpop.f32.mrb[0].mxu0
        %v1242 = vadd.f32 0.0, %v1241
        %v1243 = vpop.f32.mrb[0].mxu0
        %1244 = vmatprep.mubr.bf16.mxu0 0
        %1245 = vmatmul.mubr.bf16.gmra.mrb[0].mxu0 %v1140
        %v1246 = vpop.f32.mrb[0].mxu0
        %v1247 = vadd.f32 0.0, %v1246
        %v1248 = vpop.f32.mrb[0].mxu0
        %v1249 = vpop.f32.mrb[0].mxu0
        %v1250 = vadd.f32 0.0, %v1249
        %v1251 = vpop.f32.mrb[0].mxu0
        %1252 = vmatprep.mubr.bf16.mxu0 0
        %1253 = vmatmul.mubr.bf16.gmra.mrb[0].mxu0 %v1143
        %v1254 = vpop.f32.mrb[0].mxu0
        %v1255 = vadd.f32 0.0, %v1254
        %v1256 = vpop.f32.mrb[0].mxu0
        %v1257 = vpop.f32.mrb[0].mxu0
        %v1258 = vadd.f32 0.0, %v1257
        %v1259 = vpop.f32.mrb[0].mxu0
        %1260 = vmatprep.mubr.bf16.mxu0 0
        %1261 = vmatmul.mubr.bf16.gmra.mrb[0].mxu0 %v1146
        %v1262 = vpop.f32.mrb[0].mxu0
        %v1263 = vadd.f32 0.0, %v1262
        %v1264 = vpop.f32.mrb[0].mxu0
        %v1265 = vpop.f32.mrb[0].mxu0
        %v1266 = vadd.f32 0.0, %v1265
        %v1267 = vpop.f32.mrb[0].mxu0
        %1268 = vmatprep.mubr.bf16.mxu0 0
        %1269 = vmatmul.mubr.bf16.gmra.mrb[0].mxu0 %v1149
        %v1270 = vpop.f32.mrb[0].mxu0
        %v1271 = vadd.f32 0.0, %v1270
        %v1272 = vpop.f32.mrb[0].mxu0
        %v1273 = vpop.f32.mrb[0].mxu0
        %v1274 = vadd.f32 0.0, %v1273
        %v1275 = vpop.f32.mrb[0].mxu0
        %1276 = vmatprep.mubr.bf16.mxu0 0
        %1277 = vmatmul.mubr.bf16.gmra.mrb[0].mxu0 %v1152
        %v1278 = vpop.f32.mrb[0].mxu0
        %v1279 = vadd.f32 0.0, %v1278
        %v1280 = vpop.f32.mrb[0].mxu0
        %v1281 = vpop.f32.mrb[0].mxu0
        %v1282 = vadd.f32 0.0, %v1281
        %v1283 = vpop.f32.mrb[0].mxu0
        %1284 = vmatprep.mubr.bf16.mxu0 0
        %1285 = vmatmul.mubr.bf16.gmra.mrb[0].mxu0 %v1155
        %v1286 = vpop.f32.mrb[0].mxu0
        %v1287 = vadd.f32 0.0, %v1286
        %v1288 = vpop.f32.mrb[0].mxu0
        %v1289 = vpop.f32.mrb[0].mxu0
        %v1290 = vadd.f32 0.0, %v1289
        %v1291 = vpop.f32.mrb[0].mxu0
        %1292 = vmatprep.mubr.bf16.mxu0 0
        %1293 = vmatmul.mubr.bf16.gmra.mrb[0].mxu0 %v1158
        %v1294 = vpop.f32.mrb[0].mxu0
        %v1295 = vadd.f32 0.0, %v1294
        %v1296 = vpop.f32.mrb[0].mxu0
        %v1297 = vpop.f32.mrb[0].mxu0
        %v1298 = vadd.f32 0.0, %v1297
        %v1299 = vpop.f32.mrb[0].mxu0
        %1300 = vmatprep.mubr.bf16.mxu0 0
        %1301 = vmatmul.mubr.bf16.gmra.mrb[0].mxu0 %v1161
        %v1302 = vpop.f32.mrb[0].mxu0
        %v1303 = vadd.f32 0.0, %v1302
        %v1304 = vpop.f32.mrb[0].mxu0
        %v1305 = vpop.f32.mrb[0].mxu0
        %v1306 = vadd.f32 0.0, %v1305
        %v1307 = vpop.f32.mrb[0].mxu0
        %1308 = vmatprep.mubr.bf16.mxu0 0
        %1309 = vmatmul.mubr.bf16.gmra.mrb[0].mxu0 %v1164
        %v1310 = vpop.f32.mrb[0].mxu0
        %v1311 = vadd.f32 0.0, %v1310
        %v1312 = vpop.f32.mrb[0].mxu0
        %v1313 = vpop.f32.mrb[0].mxu0
        %v1314 = vadd.f32 0.0, %v1313
        %v1315 = vpop.f32.mrb[0].mxu0
        %1316 = vmatprep.mubr.bf16.mxu0 0
        %1317 = vmatmul.mubr.bf16.gmra.mrb[0].mxu0 %v1167
        %v1318 = vpop.f32.mrb[0].mxu0
        %v1319 = vadd.f32 0.0, %v1318
        %v1320 = vpop.f32.mrb[0].mxu0
        %v1321 = vpop.f32.mrb[0].mxu0
        %v1322 = vadd.f32 0.0, %v1321
        %v1323 = vpop.f32.mrb[0].mxu0
        %1324 = vmatprep.mubr.bf16.mxu0 0
        %1325 = vmatmul.mubr.bf16.gmra.mrb[0].mxu0 %v1170
        %v1326 = vpop.f32.mrb[0].mxu0
        %v1327 = vadd.f32 0.0, %v1326
        %v1328 = vpop.f32.mrb[0].mxu0
        %v1329 = vpop.f32.mrb[0].mxu0
        %v1330 = vadd.f32 0.0, %v1329
        %v1331 = vpop.f32.mrb[0].mxu0
        %1332 = vdwg.mxu0
        %1333 = vrot.lane.b32.xlu0 %v593, 32
        %v1334 = vpop.permute.xlu0 %1333
        %1335 = vrot.lane.b32.xlu0 %v594, 32
        %v1336 = vpop.permute.xlu0 %1335
        %1337 = vrot.lane.b32.xlu0 %v595, 32
        %v1338 = vpop.permute.xlu0 %1337
        %1339 = vrot.lane.b32.xlu0 %v596, 32
        %v1340 = vpop.permute.xlu0 %1339
        %1341 = vrot.lane.b32.xlu0 %v597, 32
        %v1342 = vpop.permute.xlu0 %1341
        %1343 = vrot.lane.b32.xlu0 %v598, 32
        %v1344 = vpop.permute.xlu0 %1343
        %1345 = vrot.lane.b32.xlu0 %v599, 32
        %v1346 = vpop.permute.xlu0 %1345
        %1347 = vrot.lane.b32.xlu0 %v600, 32
        %v1348 = vpop.permute.xlu0 %1347
        %1349 = vrot.lane.b32.xlu0 %v601, 32
        %v1350 = vpop.permute.xlu0 %1349
        %1351 = vrot.lane.b32.xlu0 %v602, 32
        %v1352 = vpop.permute.xlu0 %1351
        %1353 = vrot.lane.b32.xlu0 %v603, 32
        %v1354 = vpop.permute.xlu0 %1353
        %1355 = vrot.lane.b32.xlu0 %v604, 32
        %v1356 = vpop.permute.xlu0 %1355
        %1357 = vrot.lane.b32.xlu0 %v605, 32
        %v1358 = vpop.permute.xlu0 %1357
        %1359 = vrot.lane.b32.xlu0 %v606, 32
        %v1360 = vpop.permute.xlu0 %1359
        %1361 = vrot.lane.b32.xlu0 %v607, 32
        %v1362 = vpop.permute.xlu0 %1361
        %1363 = vrot.lane.b32.xlu0 %v608, 32
        %v1364 = vpop.permute.xlu0 %1363
        %v1366 = vsel %vm625, %v1334, 0
        %v1369 = vsel %vm625, %v1336, 0
        %v1372 = vsel %vm625, %v1338, 0
        %v1375 = vsel %vm625, %v1340, 0
        %v1378 = vsel %vm625, %v1342, 0
        %v1381 = vsel %vm625, %v1344, 0
        %v1384 = vsel %vm625, %v1346, 0
        %v1387 = vsel %vm625, %v1348, 0
        %v1390 = vsel %vm625, %v1350, 0
        %v1393 = vsel %vm625, %v1352, 0
        %v1396 = vsel %vm625, %v1354, 0
        %v1399 = vsel %vm625, %v1356, 0
        %v1402 = vsel %vm625, %v1358, 0
        %v1405 = vsel %vm625, %v1360, 0
        %v1408 = vsel %vm625, %v1362, 0
        %v1411 = vsel %vm625, %v1364, 0
        %1413 = vmatprep.subr.bf16.mxu0 0
        %1414 = vmatpush1.bf16.msra.mxu0 %v621
        %1415 = vmatprep.subr.bf16.mxu0 0
        %1416 = vmatpush1.bf16.msra.mxu0 %v622
        %1417 = vmatprep.subr.bf16.mxu0 0
        %1418 = vmatpush1.bf16.msra.mxu0 0
        %1419 = vmatprep.subr.bf16.mxu0 0
        %1420 = vmatpush1.bf16.msra.mxu0 0
        %1421 = vmatprep.subr.bf16.mxu0 0
        %1422 = vmatpush1.bf16.msra.mxu0 0
        %1423 = vmatprep.subr.bf16.mxu0 0
        %1424 = vmatpush1.bf16.msra.mxu0 0
        %1425 = vmatprep.subr.bf16.mxu0 0
        %1426 = vmatpush1.bf16.msra.mxu0 0
        %1427 = vmatprep.subr.bf16.mxu0 0
        %1428 = vmatpush1.bf16.msra.mxu0 0
        %1429 = vmatprep.subr.bf16.mxu0 0
        %1430 = vmatpush1.bf16.msra.mxu0 0
        %1431 = vmatprep.subr.bf16.mxu0 0
        %1432 = vmatpush1.bf16.msra.mxu0 0
        %1433 = vmatprep.subr.bf16.mxu0 0
        %1434 = vmatpush1.bf16.msra.mxu0 0
        %1435 = vmatprep.subr.bf16.mxu0 0
        %1436 = vmatpush1.bf16.msra.mxu0 0
        %1437 = vmatprep.subr.bf16.mxu0 0
        %1438 = vmatpush1.bf16.msra.mxu0 0
        %1439 = vmatprep.subr.bf16.mxu0 0
        %1440 = vmatpush1.bf16.msra.mxu0 0
        %1441 = vmatprep.subr.bf16.mxu0 0
        %1442 = vmatpush1.bf16.msra.mxu0 0
        %1443 = vmatprep.subr.bf16.mxu0 0
        %1444 = vmatpush1.bf16.msra.mxu0 0
        %1445 = vmatprep.mubr.bf16.mxu0 0
        %1446 = vmatmul.mubr.bf16.gmra.mrb[0].mxu0 %v1366
        %v1447 = vpop.f32.mrb[0].mxu0
        %v1448 = vadd.f32 0.0, %v1447
        %v1449 = vpop.f32.mrb[0].mxu0
        %v1450 = vpop.f32.mrb[0].mxu0
        %v1451 = vadd.f32 0.0, %v1450
        %v1452 = vpop.f32.mrb[0].mxu0
        %1453 = vmatprep.mubr.bf16.mxu0 0
        %1454 = vmatmul.mubr.bf16.gmra.mrb[0].mxu0 %v1369
        %v1455 = vpop.f32.mrb[0].mxu0
        %v1456 = vadd.f32 0.0, %v1455
        %v1457 = vpop.f32.mrb[0].mxu0
        %v1458 = vpop.f32.mrb[0].mxu0
        %v1459 = vadd.f32 0.0, %v1458
        %v1460 = vpop.f32.mrb[0].mxu0
        %1461 = vmatprep.mubr.bf16.mxu0 0
        %1462 = vmatmul.mubr.bf16.gmra.mrb[0].mxu0 %v1372
        %v1463 = vpop.f32.mrb[0].mxu0
        %v1464 = vadd.f32 0.0, %v1463
        %v1465 = vpop.f32.mrb[0].mxu0
        %v1466 = vpop.f32.mrb[0].mxu0
        %v1467 = vadd.f32 0.0, %v1466
        %v1468 = vpop.f32.mrb[0].mxu0
        %1469 = vmatprep.mubr.bf16.mxu0 0
        %1470 = vmatmul.mubr.bf16.gmra.mrb[0].mxu0 %v1375
        %v1471 = vpop.f32.mrb[0].mxu0
        %v1472 = vadd.f32 0.0, %v1471
        %v1473 = vpop.f32.mrb[0].mxu0
        %v1474 = vpop.f32.mrb[0].mxu0
        %v1475 = vadd.f32 0.0, %v1474
        %v1476 = vpop.f32.mrb[0].mxu0
        %1477 = vmatprep.mubr.bf16.mxu0 0
        %1478 = vmatmul.mubr.bf16.gmra.mrb[0].mxu0 %v1378
        %v1479 = vpop.f32.mrb[0].mxu0
        %v1480 = vadd.f32 0.0, %v1479
        %v1481 = vpop.f32.mrb[0].mxu0
        %v1482 = vpop.f32.mrb[0].mxu0
        %v1483 = vadd.f32 0.0, %v1482
        %v1484 = vpop.f32.mrb[0].mxu0
        %1485 = vmatprep.mubr.bf16.mxu0 0
        %1486 = vmatmul.mubr.bf16.gmra.mrb[0].mxu0 %v1381
        %v1487 = vpop.f32.mrb[0].mxu0
        %v1488 = vadd.f32 0.0, %v1487
        %v1489 = vpop.f32.mrb[0].mxu0
        %v1490 = vpop.f32.mrb[0].mxu0
        %v1491 = vadd.f32 0.0, %v1490
        %v1492 = vpop.f32.mrb[0].mxu0
        %1493 = vmatprep.mubr.bf16.mxu0 0
        %1494 = vmatmul.mubr.bf16.gmra.mrb[0].mxu0 %v1384
        %v1495 = vpop.f32.mrb[0].mxu0
        %v1496 = vadd.f32 0.0, %v1495
        %v1497 = vpop.f32.mrb[0].mxu0
        %v1498 = vpop.f32.mrb[0].mxu0
        %v1499 = vadd.f32 0.0, %v1498
        %v1500 = vpop.f32.mrb[0].mxu0
        %1501 = vmatprep.mubr.bf16.mxu0 0
        %1502 = vmatmul.mubr.bf16.gmra.mrb[0].mxu0 %v1387
        %v1503 = vpop.f32.mrb[0].mxu0
        %v1504 = vadd.f32 0.0, %v1503
        %v1505 = vpop.f32.mrb[0].mxu0
        %v1506 = vpop.f32.mrb[0].mxu0
        %v1507 = vadd.f32 0.0, %v1506
        %v1508 = vpop.f32.mrb[0].mxu0
        %1509 = vmatprep.mubr.bf16.mxu0 0
        %1510 = vmatmul.mubr.bf16.gmra.mrb[0].mxu0 %v1390
        %v1511 = vpop.f32.mrb[0].mxu0
        %v1512 = vadd.f32 0.0, %v1511
        %v1513 = vpop.f32.mrb[0].mxu0
        %v1514 = vpop.f32.mrb[0].mxu0
        %v1515 = vadd.f32 0.0, %v1514
        %v1516 = vpop.f32.mrb[0].mxu0
        %1517 = vmatprep.mubr.bf16.mxu0 0
        %1518 = vmatmul.mubr.bf16.gmra.mrb[0].mxu0 %v1393
        %v1519 = vpop.f32.mrb[0].mxu0
        %v1520 = vadd.f32 0.0, %v1519
        %v1521 = vpop.f32.mrb[0].mxu0
        %v1522 = vpop.f32.mrb[0].mxu0
        %v1523 = vadd.f32 0.0, %v1522
        %v1524 = vpop.f32.mrb[0].mxu0
        %1525 = vmatprep.mubr.bf16.mxu0 0
        %1526 = vmatmul.mubr.bf16.gmra.mrb[0].mxu0 %v1396
        %v1527 = vpop.f32.mrb[0].mxu0
        %v1528 = vadd.f32 0.0, %v1527
        %v1529 = vpop.f32.mrb[0].mxu0
        %v1530 = vpop.f32.mrb[0].mxu0
        %v1531 = vadd.f32 0.0, %v1530
        %v1532 = vpop.f32.mrb[0].mxu0
        %1533 = vmatprep.mubr.bf16.mxu0 0
        %1534 = vmatmul.mubr.bf16.gmra.mrb[0].mxu0 %v1399
        %v1535 = vpop.f32.mrb[0].mxu0
        %v1536 = vadd.f32 0.0, %v1535
        %v1537 = vpop.f32.mrb[0].mxu0
        %v1538 = vpop.f32.mrb[0].mxu0
        %v1539 = vadd.f32 0.0, %v1538
        %v1540 = vpop.f32.mrb[0].mxu0
        %1541 = vmatprep.mubr.bf16.mxu0 0
        %1542 = vmatmul.mubr.bf16.gmra.mrb[0].mxu0 %v1402
        %v1543 = vpop.f32.mrb[0].mxu0
        %v1544 = vadd.f32 0.0, %v1543
        %v1545 = vpop.f32.mrb[0].mxu0
        %v1546 = vpop.f32.mrb[0].mxu0
        %v1547 = vadd.f32 0.0, %v1546
        %v1548 = vpop.f32.mrb[0].mxu0
        %1549 = vmatprep.mubr.bf16.mxu0 0
        %1550 = vmatmul.mubr.bf16.gmra.mrb[0].mxu0 %v1405
        %v1551 = vpop.f32.mrb[0].mxu0
        %v1552 = vadd.f32 0.0, %v1551
        %v1553 = vpop.f32.mrb[0].mxu0
        %v1554 = vpop.f32.mrb[0].mxu0
        %v1555 = vadd.f32 0.0, %v1554
        %v1556 = vpop.f32.mrb[0].mxu0
        %1557 = vmatprep.mubr.bf16.mxu0 0
        %1558 = vmatmul.mubr.bf16.gmra.mrb[0].mxu0 %v1408
        %v1559 = vpop.f32.mrb[0].mxu0
        %v1560 = vadd.f32 0.0, %v1559
        %v1561 = vpop.f32.mrb[0].mxu0
        %v1562 = vpop.f32.mrb[0].mxu0
        %v1563 = vadd.f32 0.0, %v1562
        %v1564 = vpop.f32.mrb[0].mxu0
        %1565 = vmatprep.mubr.bf16.mxu0 0
        %1566 = vmatmul.mubr.bf16.gmra.mrb[0].mxu0 %v1411
        %v1567 = vpop.f32.mrb[0].mxu0
        %v1568 = vadd.f32 0.0, %v1567
        %v1569 = vpop.f32.mrb[0].mxu0
        %v1570 = vpop.f32.mrb[0].mxu0
        %v1571 = vadd.f32 0.0, %v1570
        %v1572 = vpop.f32.mrb[0].mxu0
        %1573 = vdwg.mxu0
        %1606 = vrot.lane.b32.xlu0 %v966, 32
        %v1607 = vpop.permute.xlu0 %1606
        %1608 = vrot.lane.b32.xlu0 %v969, 32
        %v1609 = vpop.permute.xlu0 %1608
        %1610 = vrot.lane.b32.xlu0 %v974, 32
        %v1611 = vpop.permute.xlu0 %1610
        %1612 = vrot.lane.b32.xlu0 %v977, 32
        %v1613 = vpop.permute.xlu0 %1612
        %1614 = vrot.lane.b32.xlu0 %v982, 32
        %v1615 = vpop.permute.xlu0 %1614
        %1616 = vrot.lane.b32.xlu0 %v985, 32
        %v1617 = vpop.permute.xlu0 %1616
        %1618 = vrot.lane.b32.xlu0 %v990, 32
        %v1619 = vpop.permute.xlu0 %1618
        %1620 = vrot.lane.b32.xlu0 %v993, 32
        %v1621 = vpop.permute.xlu0 %1620
        %1622 = vrot.lane.b32.xlu0 %v998, 32
        %v1623 = vpop.permute.xlu0 %1622
        %1624 = vrot.lane.b32.xlu0 %v1001, 32
        %v1625 = vpop.permute.xlu0 %1624
        %1626 = vrot.lane.b32.xlu0 %v1006, 32
        %v1627 = vpop.permute.xlu0 %1626
        %1628 = vrot.lane.b32.xlu0 %v1009, 32
        %v1629 = vpop.permute.xlu0 %1628
        %1630 = vrot.lane.b32.xlu0 %v1014, 32
        %v1631 = vpop.permute.xlu0 %1630
        %1632 = vrot.lane.b32.xlu0 %v1017, 32
        %v1633 = vpop.permute.xlu0 %1632
        %1634 = vrot.lane.b32.xlu0 %v1022, 32
        %v1635 = vpop.permute.xlu0 %1634
        %1636 = vrot.lane.b32.xlu0 %v1025, 32
        %v1637 = vpop.permute.xlu0 %1636
        %1638 = vrot.lane.b32.xlu0 %v1030, 32
        %v1639 = vpop.permute.xlu0 %1638
        %1640 = vrot.lane.b32.xlu0 %v1033, 32
        %v1641 = vpop.permute.xlu0 %1640
        %1642 = vrot.lane.b32.xlu0 %v1038, 32
        %v1643 = vpop.permute.xlu0 %1642
        %1644 = vrot.lane.b32.xlu0 %v1041, 32
        %v1645 = vpop.permute.xlu0 %1644
        %1646 = vrot.lane.b32.xlu0 %v1046, 32
        %v1647 = vpop.permute.xlu0 %1646
        %1648 = vrot.lane.b32.xlu0 %v1049, 32
        %v1649 = vpop.permute.xlu0 %1648
        %1650 = vrot.lane.b32.xlu0 %v1054, 32
        %v1651 = vpop.permute.xlu0 %1650
        %1652 = vrot.lane.b32.xlu0 %v1057, 32
        %v1653 = vpop.permute.xlu0 %1652
        %1654 = vrot.lane.b32.xlu0 %v1062, 32
        %v1655 = vpop.permute.xlu0 %1654
        %1656 = vrot.lane.b32.xlu0 %v1065, 32
        %v1657 = vpop.permute.xlu0 %1656
        %1658 = vrot.lane.b32.xlu0 %v1070, 32
        %v1659 = vpop.permute.xlu0 %1658
        %1660 = vrot.lane.b32.xlu0 %v1073, 32
        %v1661 = vpop.permute.xlu0 %1660
        %1662 = vrot.lane.b32.xlu0 %v1078, 32
        %v1663 = vpop.permute.xlu0 %1662
        %1664 = vrot.lane.b32.xlu0 %v1081, 32
        %v1665 = vpop.permute.xlu0 %1664
        %1666 = vrot.lane.b32.xlu0 %v1086, 32
        %v1667 = vpop.permute.xlu0 %1666
        %1668 = vrot.lane.b32.xlu0 %v1089, 32
        %v1669 = vpop.permute.xlu0 %1668
        %1734 = vrot.lane.b32.xlu0 %v1207, 64
        %v1735 = vpop.permute.xlu0 %1734
        %1736 = vrot.lane.b32.xlu0 %v1210, 64
        %v1737 = vpop.permute.xlu0 %1736
        %1738 = vrot.lane.b32.xlu0 %v1215, 64
        %v1739 = vpop.permute.xlu0 %1738
        %1740 = vrot.lane.b32.xlu0 %v1218, 64
        %v1741 = vpop.permute.xlu0 %1740
        %1742 = vrot.lane.b32.xlu0 %v1223, 64
        %v1743 = vpop.permute.xlu0 %1742
        %1744 = vrot.lane.b32.xlu0 %v1226, 64
        %v1745 = vpop.permute.xlu0 %1744
        %1746 = vrot.lane.b32.xlu0 %v1231, 64
        %v1747 = vpop.permute.xlu0 %1746
        %1748 = vrot.lane.b32.xlu0 %v1234, 64
        %v1749 = vpop.permute.xlu0 %1748
        %1750 = vrot.lane.b32.xlu0 %v1239, 64
        %v1751 = vpop.permute.xlu0 %1750
        %1752 = vrot.lane.b32.xlu0 %v1242, 64
        %v1753 = vpop.permute.xlu0 %1752
        %1754 = vrot.lane.b32.xlu0 %v1247, 64
        %v1755 = vpop.permute.xlu0 %1754
        %1756 = vrot.lane.b32.xlu0 %v1250, 64
        %v1757 = vpop.permute.xlu0 %1756
        %1758 = vrot.lane.b32.xlu0 %v1255, 64
        %v1759 = vpop.permute.xlu0 %1758
        %1760 = vrot.lane.b32.xlu0 %v1258, 64
        %v1761 = vpop.permute.xlu0 %1760
        %1762 = vrot.lane.b32.xlu0 %v1263, 64
        %v1763 = vpop.permute.xlu0 %1762
        %1764 = vrot.lane.b32.xlu0 %v1266, 64
        %v1765 = vpop.permute.xlu0 %1764
        %1766 = vrot.lane.b32.xlu0 %v1271, 64
        %v1767 = vpop.permute.xlu0 %1766
        %1768 = vrot.lane.b32.xlu0 %v1274, 64
        %v1769 = vpop.permute.xlu0 %1768
        %1770 = vrot.lane.b32.xlu0 %v1279, 64
        %v1771 = vpop.permute.xlu0 %1770
        %1772 = vrot.lane.b32.xlu0 %v1282, 64
        %v1773 = vpop.permute.xlu0 %1772
        %1774 = vrot.lane.b32.xlu0 %v1287, 64
        %v1775 = vpop.permute.xlu0 %1774
        %1776 = vrot.lane.b32.xlu0 %v1290, 64
        %v1777 = vpop.permute.xlu0 %1776
        %1778 = vrot.lane.b32.xlu0 %v1295, 64
        %v1779 = vpop.permute.xlu0 %1778
        %1780 = vrot.lane.b32.xlu0 %v1298, 64
        %v1781 = vpop.permute.xlu0 %1780
        %1782 = vrot.lane.b32.xlu0 %v1303, 64
        %v1783 = vpop.permute.xlu0 %1782
        %1784 = vrot.lane.b32.xlu0 %v1306, 64
        %v1785 = vpop.permute.xlu0 %1784
        %1786 = vrot.lane.b32.xlu0 %v1311, 64
        %v1787 = vpop.permute.xlu0 %1786
        %1788 = vrot.lane.b32.xlu0 %v1314, 64
        %v1789 = vpop.permute.xlu0 %1788
        %1790 = vrot.lane.b32.xlu0 %v1319, 64
        %v1791 = vpop.permute.xlu0 %1790
        %1792 = vrot.lane.b32.xlu0 %v1322, 64
        %v1793 = vpop.permute.xlu0 %1792
        %1794 = vrot.lane.b32.xlu0 %v1327, 64
        %v1795 = vpop.permute.xlu0 %1794
        %1796 = vrot.lane.b32.xlu0 %v1330, 64
        %v1797 = vpop.permute.xlu0 %1796
        %1862 = vrot.lane.b32.xlu0 %v1448, 96
        %v1863 = vpop.permute.xlu0 %1862
        %1864 = vrot.lane.b32.xlu0 %v1451, 96
        %v1865 = vpop.permute.xlu0 %1864
        %1866 = vrot.lane.b32.xlu0 %v1456, 96
        %v1867 = vpop.permute.xlu0 %1866
        %1868 = vrot.lane.b32.xlu0 %v1459, 96
        %v1869 = vpop.permute.xlu0 %1868
        %1870 = vrot.lane.b32.xlu0 %v1464, 96
        %v1871 = vpop.permute.xlu0 %1870
        %1872 = vrot.lane.b32.xlu0 %v1467, 96
        %v1873 = vpop.permute.xlu0 %1872
        %1874 = vrot.lane.b32.xlu0 %v1472, 96
        %v1875 = vpop.permute.xlu0 %1874
        %1876 = vrot.lane.b32.xlu0 %v1475, 96
        %v1877 = vpop.permute.xlu0 %1876
        %1878 = vrot.lane.b32.xlu0 %v1480, 96
        %v1879 = vpop.permute.xlu0 %1878
        %1880 = vrot.lane.b32.xlu0 %v1483, 96
        %v1881 = vpop.permute.xlu0 %1880
        %1882 = vrot.lane.b32.xlu0 %v1488, 96
        %v1883 = vpop.permute.xlu0 %1882
        %1884 = vrot.lane.b32.xlu0 %v1491, 96
        %v1885 = vpop.permute.xlu0 %1884
        %1886 = vrot.lane.b32.xlu0 %v1496, 96
        %v1887 = vpop.permute.xlu0 %1886
        %1888 = vrot.lane.b32.xlu0 %v1499, 96
        %v1889 = vpop.permute.xlu0 %1888
        %1890 = vrot.lane.b32.xlu0 %v1504, 96
        %v1891 = vpop.permute.xlu0 %1890
        %1892 = vrot.lane.b32.xlu0 %v1507, 96
        %v1893 = vpop.permute.xlu0 %1892
        %1894 = vrot.lane.b32.xlu0 %v1512, 96
        %v1895 = vpop.permute.xlu0 %1894
        %1896 = vrot.lane.b32.xlu0 %v1515, 96
        %v1897 = vpop.permute.xlu0 %1896
        %1898 = vrot.lane.b32.xlu0 %v1520, 96
        %v1899 = vpop.permute.xlu0 %1898
        %1900 = vrot.lane.b32.xlu0 %v1523, 96
        %v1901 = vpop.permute.xlu0 %1900
        %1902 = vrot.lane.b32.xlu0 %v1528, 96
        %v1903 = vpop.permute.xlu0 %1902
        %1904 = vrot.lane.b32.xlu0 %v1531, 96
        %v1905 = vpop.permute.xlu0 %1904
        %1906 = vrot.lane.b32.xlu0 %v1536, 96
        %v1907 = vpop.permute.xlu0 %1906
        %1908 = vrot.lane.b32.xlu0 %v1539, 96
        %v1909 = vpop.permute.xlu0 %1908
        %1910 = vrot.lane.b32.xlu0 %v1544, 96
        %v1911 = vpop.permute.xlu0 %1910
        %1912 = vrot.lane.b32.xlu0 %v1547, 96
        %v1913 = vpop.permute.xlu0 %1912
        %1914 = vrot.lane.b32.xlu0 %v1552, 96
        %v1915 = vpop.permute.xlu0 %1914
        %1916 = vrot.lane.b32.xlu0 %v1555, 96
        %v1917 = vpop.permute.xlu0 %1916
        %1918 = vrot.lane.b32.xlu0 %v1560, 96
        %v1919 = vpop.permute.xlu0 %1918
        %1920 = vrot.lane.b32.xlu0 %v1563, 96
        %v1921 = vpop.permute.xlu0 %1920
        %1922 = vrot.lane.b32.xlu0 %v1568, 96
        %v1923 = vpop.permute.xlu0 %1922
        %1924 = vrot.lane.b32.xlu0 %v1571, 96
        %v1925 = vpop.permute.xlu0 %1924
        %v1958 = vsel %vm625, %v709, %v1607
        %v1959 = vsel %vm625, %v712, %v1609
        %v1960 = vsel %vm625, %v717, %v1611
        %v1961 = vsel %vm625, %v720, %v1613
        %v1962 = vsel %vm625, %v725, %v1615
        %v1963 = vsel %vm625, %v728, %v1617
        %v1964 = vsel %vm625, %v733, %v1619
        %v1965 = vsel %vm625, %v736, %v1621
        %v1966 = vsel %vm625, %v741, %v1623
        %v1967 = vsel %vm625, %v744, %v1625
        %v1968 = vsel %vm625, %v749, %v1627
        %v1969 = vsel %vm625, %v752, %v1629
        %v1970 = vsel %vm625, %v757, %v1631
        %v1971 = vsel %vm625, %v760, %v1633
        %v1972 = vsel %vm625, %v765, %v1635
        %v1973 = vsel %vm625, %v768, %v1637
        %v1974 = vsel %vm625, %v773, %v1639
        %v1975 = vsel %vm625, %v776, %v1641
        %v1976 = vsel %vm625, %v781, %v1643
        %v1977 = vsel %vm625, %v784, %v1645
        %v1978 = vsel %vm625, %v789, %v1647
        %v1979 = vsel %vm625, %v792, %v1649
        %v1980 = vsel %vm625, %v797, %v1651
        %v1981 = vsel %vm625, %v800, %v1653
        %v1982 = vsel %vm625, %v805, %v1655
        %v1983 = vsel %vm625, %v808, %v1657
        %v1984 = vsel %vm625, %v813, %v1659
        %v1985 = vsel %vm625, %v816, %v1661
        %v1986 = vsel %vm625, %v821, %v1663
        %v1987 = vsel %vm625, %v824, %v1665
        %v1988 = vsel %vm625, %v829, %v1667
        %v1989 = vsel %vm625, %v832, %v1669
        %vm1990 = vcmask 523264
        %v1991 = vsel %vm1990, %v1958, %v1735
        %v1992 = vsel %vm1990, %v1959, %v1737
        %v1993 = vsel %vm1990, %v1960, %v1739
        %v1994 = vsel %vm1990, %v1961, %v1741
        %v1995 = vsel %vm1990, %v1962, %v1743
        %v1996 = vsel %vm1990, %v1963, %v1745
        %v1997 = vsel %vm1990, %v1964, %v1747
        %v1998 = vsel %vm1990, %v1965, %v1749
        %v1999 = vsel %vm1990, %v1966, %v1751
        %v2000 = vsel %vm1990, %v1967, %v1753
        %v2001 = vsel %vm1990, %v1968, %v1755
        %v2002 = vsel %vm1990, %v1969, %v1757
        %v2003 = vsel %vm1990, %v1970, %v1759
        %v2004 = vsel %vm1990, %v1971, %v1761
        %v2005 = vsel %vm1990, %v1972, %v1763
        %v2006 = vsel %vm1990, %v1973, %v1765
        %v2007 = vsel %vm1990, %v1974, %v1767
        %v2008 = vsel %vm1990, %v1975, %v1769
        %v2009 = vsel %vm1990, %v1976, %v1771
        %v2010 = vsel %vm1990, %v1977, %v1773
        %v2011 = vsel %vm1990, %v1978, %v1775
        %v2012 = vsel %vm1990, %v1979, %v1777
        %v2013 = vsel %vm1990, %v1980, %v1779
        %v2014 = vsel %vm1990, %v1981, %v1781
        %v2015 = vsel %vm1990, %v1982, %v1783
        %v2016 = vsel %vm1990, %v1983, %v1785
        %v2017 = vsel %vm1990, %v1984, %v1787
        %v2018 = vsel %vm1990, %v1985, %v1789
        %v2019 = vsel %vm1990, %v1986, %v1791
        %v2020 = vsel %vm1990, %v1987, %v1793
        %v2021 = vsel %vm1990, %v1988, %v1795
        %v2022 = vsel %vm1990, %v1989, %v1797
        %vm2023 = vcmask 785408
        %v2024 = vsel %vm2023, %v1991, %v1863
        %v2025 = vsel %vm2023, %v1992, %v1865
        %v2026 = vsel %vm2023, %v1993, %v1867
        %v2027 = vsel %vm2023, %v1994, %v1869
        %v2028 = vsel %vm2023, %v1995, %v1871
        %v2029 = vsel %vm2023, %v1996, %v1873
        %v2030 = vsel %vm2023, %v1997, %v1875
        %v2031 = vsel %vm2023, %v1998, %v1877
        %v2032 = vsel %vm2023, %v1999, %v1879
        %v2033 = vsel %vm2023, %v2000, %v1881
        %v2034 = vsel %vm2023, %v2001, %v1883
        %v2035 = vsel %vm2023, %v2002, %v1885
        %v2036 = vsel %vm2023, %v2003, %v1887
        %v2037 = vsel %vm2023, %v2004, %v1889
        %v2038 = vsel %vm2023, %v2005, %v1891
        %v2039 = vsel %vm2023, %v2006, %v1893
        %v2040 = vsel %vm2023, %v2007, %v1895
        %v2041 = vsel %vm2023, %v2008, %v1897
        %v2042 = vsel %vm2023, %v2009, %v1899
        %v2043 = vsel %vm2023, %v2010, %v1901
        %v2044 = vsel %vm2023, %v2011, %v1903
        %v2045 = vsel %vm2023, %v2012, %v1905
        %v2046 = vsel %vm2023, %v2013, %v1907
        %v2047 = vsel %vm2023, %v2014, %v1909
        %v2048 = vsel %vm2023, %v2015, %v1911
        %v2049 = vsel %vm2023, %v2016, %v1913
        %v2050 = vsel %vm2023, %v2017, %v1915
        %v2051 = vsel %vm2023, %v2018, %v1917
        %v2052 = vsel %vm2023, %v2019, %v1919
        %v2053 = vsel %vm2023, %v2020, %v1921
        %v2054 = vsel %vm2023, %v2021, %v1923
        %v2055 = vsel %vm2023, %v2022, %v1925
        %v2056 = vld [vmem:[%s4] sm:$0x1]
        %v2058 = vlaneseq
        %v2059 = vshrl.u32 %v2058, 7
        %v2060 = vsub.s32 0, %v2059
        %v2061 = vrot.slane %v2056, %v2060
        %v2063 = vadd.f32 %v2024, %v2061
        %v2064 = vadd.f32 %v2025, %v2061
        %v2065 = vadd.f32 %v2026, %v2061
        %v2066 = vadd.f32 %v2027, %v2061
        %v2067 = vadd.f32 %v2028, %v2061
        %v2068 = vadd.f32 %v2029, %v2061
        %v2069 = vadd.f32 %v2030, %v2061
        %v2070 = vadd.f32 %v2031, %v2061
        %v2071 = vadd.f32 %v2032, %v2061
        %v2072 = vadd.f32 %v2033, %v2061
        %v2073 = vadd.f32 %v2034, %v2061
        %v2074 = vadd.f32 %v2035, %v2061
        %v2075 = vadd.f32 %v2036, %v2061
        %v2076 = vadd.f32 %v2037, %v2061
        %v2077 = vadd.f32 %v2038, %v2061
        %v2078 = vadd.f32 %v2039, %v2061
        %v2079 = vadd.f32 %v2040, %v2061
        %v2080 = vadd.f32 %v2041, %v2061
        %v2081 = vadd.f32 %v2042, %v2061
        %v2082 = vadd.f32 %v2043, %v2061
        %v2083 = vadd.f32 %v2044, %v2061
        %v2084 = vadd.f32 %v2045, %v2061
        %v2085 = vadd.f32 %v2046, %v2061
        %v2086 = vadd.f32 %v2047, %v2061
        %v2087 = vadd.f32 %v2048, %v2061
        %v2088 = vadd.f32 %v2049, %v2061
        %v2089 = vadd.f32 %v2050, %v2061
        %v2090 = vadd.f32 %v2051, %v2061
        %v2091 = vadd.f32 %v2052, %v2061
        %v2092 = vadd.f32 %v2053, %v2061
        %v2093 = vadd.f32 %v2054, %v2061
        %v2094 = vadd.f32 %v2055, %v2061
        %2095 = vst [vmem:[%s218] sm:$0xff] %v2063
        %2096 = vst [vmem:[%s218 + $0x8] sm:$0xff] %v2064
        %2097 = vst [vmem:[%s218 + $0x10] sm:$0xff] %v2065
        %2098 = vst [vmem:[%s218 + $0x18] sm:$0xff] %v2066
        %2099 = vst [vmem:[%s218 + $0x20] sm:$0xff] %v2067
        %2100 = vst [vmem:[%s218 + $0x28] sm:$0xff] %v2068
        %2101 = vst [vmem:[%s218 + $0x30] sm:$0xff] %v2069
        %2102 = vst [vmem:[%s218 + $0x38] sm:$0xff] %v2070
        %2103 = vst [vmem:[%s218 + $0x40] sm:$0xff] %v2071
        %2104 = vst [vmem:[%s218 + $0x48] sm:$0xff] %v2072
        %2105 = vst [vmem:[%s218 + $0x50] sm:$0xff] %v2073
        %2106 = vst [vmem:[%s218 + $0x58] sm:$0xff] %v2074
        %2107 = vst [vmem:[%s218 + $0x60] sm:$0xff] %v2075
        %2108 = vst [vmem:[%s218 + $0x68] sm:$0xff] %v2076
        %2109 = vst [vmem:[%s218 + $0x70] sm:$0xff] %v2077
        %2110 = vst [vmem:[%s218 + $0x78] sm:$0xff] %v2078
        %2111 = vst [vmem:[%s218 + $0x80] sm:$0xff] %v2079
        %2112 = vst [vmem:[%s218 + $0x88] sm:$0xff] %v2080
        %2113 = vst [vmem:[%s218 + $0x90] sm:$0xff] %v2081
        %2114 = vst [vmem:[%s218 + $0x98] sm:$0xff] %v2082
        %2115 = vst [vmem:[%s218 + $0xa0] sm:$0xff] %v2083
        %2116 = vst [vmem:[%s218 + $0xa8] sm:$0xff] %v2084
        %2117 = vst [vmem:[%s218 + $0xb0] sm:$0xff] %v2085
        %2118 = vst [vmem:[%s218 + $0xb8] sm:$0xff] %v2086
        %2119 = vst [vmem:[%s218 + $0xc0] sm:$0xff] %v2087
        %2120 = vst [vmem:[%s218 + $0xc8] sm:$0xff] %v2088
        %2121 = vst [vmem:[%s218 + $0xd0] sm:$0xff] %v2089
        %2122 = vst [vmem:[%s218 + $0xd8] sm:$0xff] %v2090
        %2123 = vst [vmem:[%s218 + $0xe0] sm:$0xff] %v2091
        %2124 = vst [vmem:[%s218 + $0xe8] sm:$0xff] %v2092
        %2125 = vst [vmem:[%s218 + $0xf0] sm:$0xff] %v2093
        %2126 = vst [vmem:[%s218 + $0xf8] sm:$0xff] %v2094
        %s2127 = sand.u32 %s137, 1
        %s2128 = scalar_lea.sflag [#allocation3], %s2127
        %s2129 = sand.u32 %s137, 1
        %s2130 = smul.addr %s2129, 256
        %s2131 = scalar_lea.vmem [#allocation2], %s2130
        // Predicated region
        $region41: #{tpu_custom_call.1} parent=39 // pred_check
          %p2132 = pneg %p147
        $region42: #{tpu_custom_call.1} parent=39 // pred_check_branch
          %2134 = sbr.rel (%p2132) target = $region44
        $region43: #{tpu_custom_call.1} parent=39 // pred_region
          %s2135 = smul.u32 32, %s19
          %s2137 = ssub.s32 4096, 4096
          %2138 = vsyncadd %s2128, %s2137
          %s2139 = smul.addr %s2135, 128
          %s2140 = scalar_lea.hbm %s5, %s2139
          %s2141 = sshll.u32 %s2131, 4
          %s2142 = int_to_ptr.vmem [resolvable:$true] %s2141
          %2147 = dma.vmem_to_hbm [thread:$0]  %s2142, 4096, %s2140, %s2128, 128, 128, 8
        $region44: #{tpu_custom_call.1} parent=39 // pred_fallthru
          _
      $region40: #{tpu_custom_call.1} parent=5 // pred_fallthru
        _
      %p2148 = scmp.le.s32.totalorder 2, %s14
      // Predicated region
      $region45: #{tpu_custom_call.1} parent=5 // pred_check
        %p2149 = pneg %p2148
      $region46: #{tpu_custom_call.1} parent=5 // pred_check_branch
        %2151 = sbr.rel (%p2149) target = $region48
      $region47: #{tpu_custom_call.1} parent=5 // pred_region
        %s2152 = ssub.s32 %s14, 2
        // Predicated region
        $region49: #{tpu_custom_call.1} parent=47 // pred_check
          %p2153 = pneg %p153
        $region50: #{tpu_custom_call.1} parent=47 // pred_check_branch
          %2155 = sbr.rel (%p2153) target = $region52
        $region51: #{tpu_custom_call.1} parent=47 // pred_region
          %s2156 = sand.u32 %s138, 1
          %s2157 = scalar_lea.sflag [#allocation3], %s2156
          %s2158 = sand.u32 %s138, 1
          %s2159 = smul.addr %s2158, 256
          %s2160 = scalar_lea.vmem [#allocation2], %s2159
          %2161 = dma.done %s2157, 4096
        $region52: #{tpu_custom_call.1} parent=47 // pred_fallthru
          _
      $region48: #{tpu_custom_call.1} parent=5 // pred_fallthru
        _
    $region6: #{tpu_custom_call.1} parent=1 // loop_footer
      %s18 = sadd.s32 1, %s14
    $region7: #{tpu_custom_call.1} parent=1 // loop_footer_branch
      %13 = sbr.rel target = $region3
    $region8: #{tpu_custom_call.1} parent=1 // loop_exit
      _
    %2162 = vsyncpa [#allocation3], 1
    %s2163 = scalar_lea.sflag [#allocation3], 1
    %2164 = vsyncpa %s2163, 1

</llo_original>
